<compile_context>
chip_gen: v6e
topology: v6e:2x2x1
jax: 0.10.0
libtpu: 0.0.40
codegen_flags: <defaults>
</compile_context>

<pallas_src>
import functools

import jax
import jax.numpy as jnp
from jax.experimental import pallas as pl
from jax.experimental.pallas import tpu as pltpu

BN_EPS = 1e-5
COUT_PAD = 128          # lane-dense output channels
ROW_TILE_MAX = 2048     # bf16 (tile,K<=288)+(tile,128) double-buffered << 32 MiB VMEM

# (cin, cout, kernel, stride, pad) -- matches the PyTorch __init__
LAYER_DEFS = (
    (2, 8, 5, 2, 2),
    (8, 16, 3, 2, 1),
    (16, 32, 3, 2, 1),
    (32, 64, 3, 2, 1),
)


def _round_up(x, m):
    return (x + m - 1) // m * m


# ---------------------------------------------------------------------------
# Pallas kernels
# ---------------------------------------------------------------------------
def conv_block_kernel(p_ref, w_ref, b_ref, o_ref, stats_ref, *, rows_total, tile, masked):
    """One row tile of: conv-as-matmul (bf16 x bf16 -> f32) + bias + ReLU.

    p_ref:     (tile, K)   bf16 im2col patches (K = KH*KW*Cin, real channels only)
    w_ref:     (K, 128)    bf16 weights (Cout zero-padded to 128 lanes, prev BN pre-folded)
    b_ref:     (1, 128)    f32 bias (prev BN pre-folded)
    o_ref:     (tile, 128) bf16 post-ReLU output (pre-BN; BN folded into next layer)
    stats_ref: (8, 128)    f32 per-tile partials: row 0 = sum(y), row 1 = sum(y*y)
    """
    r = pl.program_id(0)
    y = jnp.dot(p_ref[...], w_ref[...], preferred_element_type=jnp.float32)
    y = jnp.maximum(y + b_ref[...], 0.0)                      # bias + ReLU in f32

    if masked:  # zero-padded rows of the last tile must not pollute the batch statistics
        row_ids = r * tile + jax.lax.broadcasted_iota(jnp.int32, (tile, 1), 0)
        ym = jnp.where(row_ids < rows_total, y, 0.0)
    else:
        ym = y
    s1 = jnp.sum(ym, axis=0, keepdims=True)                   # (1, 128) per-channel sum
    s2 = jnp.sum(ym * y, axis=0, keepdims=True)               # (1, 128) per-channel sumsq
    sel = jax.lax.broadcasted_iota(jnp.int32, (8, y.shape[1]), 0)
    stats_ref[...] = jnp.where(sel == 0, s1, jnp.where(sel == 1, s2, 0.0))

    o_ref[...] = y.astype(o_ref.dtype)


def head_kernel(x_ref, w_ref, b_ref, o_ref):
    """Fused AdaptiveAvgPool2d(1) + Linear(64 -> 1) (BN of layer 4 folded into w/b).

    x_ref: (N, Ho*Wo, 64) bf16 ; w_ref: (1, 64) f32 ; b_ref: (1, 1) f32 ; o_ref: (N, 1) f32
    """
    pooled = jnp.mean(x_ref[...].astype(jnp.float32), axis=1)           # (N, 64)
    # VPU reduce instead of a 1-lane MXU matmul.
    o_ref[...] = jnp.sum(pooled * w_ref[...], axis=-1, keepdims=True) + b_ref[...]


# ---------------------------------------------------------------------------
# pallas_call wrappers
# ---------------------------------------------------------------------------
def conv_block(patches, w_pad_f32, b_pad, rows):
    """patches: (rows, K); returns (y_bf16 (rows_pad,128), stats (num_tiles,8,128) f32)."""
    patches = patches.astype(jnp.bfloat16)
    w_bf16 = w_pad_f32.astype(jnp.bfloat16)
    _, K = patches.shape

    tile = min(ROW_TILE_MAX, _round_up(rows, 8))
    rows_pad = _round_up(rows, tile)
    if rows_pad != rows:
        patches = jnp.pad(patches, ((0, rows_pad - rows), (0, 0)))
    num_tiles = rows_pad // tile

    kernel = functools.partial(conv_block_kernel, rows_total=rows, tile=tile,
                               masked=(rows_pad != rows))
    cost = pl.CostEstimate(
        flops=2 * rows_pad * K * COUT_PAD,
        transcendentals=0,
        bytes_accessed=(rows_pad * K * 2 + K * COUT_PAD * 2 + COUT_PAD * 4
                        + rows_pad * COUT_PAD * 2 + num_tiles * 8 * COUT_PAD * 4),
    )

    y, stats = pl.pallas_call(
        kernel,
        out_shape=(jax.ShapeDtypeStruct((rows_pad, COUT_PAD), jnp.bfloat16),
                   jax.ShapeDtypeStruct((num_tiles * 8, COUT_PAD), jnp.float32)),
        grid_spec=pltpu.PrefetchScalarGridSpec(
            num_scalar_prefetch=0,
            grid=(num_tiles,),
            in_specs=[pl.BlockSpec((tile, K), lambda r: (r, 0)),
                      pl.BlockSpec((K, COUT_PAD), lambda r: (0, 0)),
                      pl.BlockSpec((1, COUT_PAD), lambda r: (0, 0))],
            out_specs=[pl.BlockSpec((tile, COUT_PAD), lambda r: (r, 0)),
                       pl.BlockSpec((8, COUT_PAD), lambda r: (r, 0))]),
        compiler_params=pltpu.CompilerParams(
            dimension_semantics=("parallel",),          # row tiles are independent
            vmem_limit_bytes=32 * 1024 * 1024),
        cost_estimate=cost,
    )(patches, w_bf16, b_pad)
    return y, stats.reshape(num_tiles, 8, COUT_PAD)


def _vmem_spec():
    return pl.BlockSpec(memory_space=pltpu.MemorySpace.VMEM)


def head(x_flat, w_head, b_head):
    n = x_flat.shape[0]
    return pl.pallas_call(
        head_kernel,
        out_shape=jax.ShapeDtypeStruct((n, 1), jnp.float32),
        in_specs=[_vmem_spec(), _vmem_spec(), _vmem_spec()],
        out_specs=_vmem_spec(),
    )(x_flat, w_head, b_head)


# ---------------------------------------------------------------------------
# Plain-JAX glue: im2col patch gather (data movement only)
# ---------------------------------------------------------------------------
def im2col(x, kh, kw, stride, pad, border_value=None):
    """x: (N,H,W,C) -> (N*Ho*Wo, KH*KW*C) patches (tap-major, channel-minor), plus Ho, Wo.

    border_value (per-channel, optional) replaces the zero spatial padding; used to make the
    folded-BN conv equivalent to convolving the zero-padded *normalized* activation.
    """
    n, h, w, c = x.shape
    xp = jnp.pad(x, ((0, 0), (pad, pad), (pad, pad), (0, 0)))
    if border_value is not None and pad > 0:
        hp, wp = h + 2 * pad, w + 2 * pad
        ri = jnp.arange(hp)[:, None]
        ci = jnp.arange(wp)[None, :]
        interior = (ri >= pad) & (ri < pad + h) & (ci >= pad) & (ci < pad + w)
        xp = jnp.where(interior[None, :, :, None], xp,
                       border_value.reshape(1, 1, 1, c).astype(xp.dtype))
    ho = (h + 2 * pad - kh) // stride + 1
    wo = (w + 2 * pad - kw) // stride + 1
    cols = []
    for i in range(kh):
        for j in range(kw):
            cols.append(xp[:, i:i + ho * stride:stride, j:j + wo * stride:stride, :])
    patches = jnp.stack(cols, axis=3)                 # (N, Ho, Wo, KH*KW, C)
    return patches.reshape(n * ho * wo, kh * kw * c), ho, wo


# ---------------------------------------------------------------------------
# Parameters (deterministic, matching the PyTorch __init__ initialization)
# ---------------------------------------------------------------------------
def make_params(key):
    keys = jax.random.split(key, len(LAYER_DEFS) + 2)
    conv_params = []
    for idx, (cin, cout, k, _stride, _pad) in enumerate(LAYER_DEFS):
        fan_in = cin * k * k
        gain = (2.0 / (1.0 + 0.1 ** 2)) ** 0.5                 # kaiming_normal_(a=0.1)
        std = gain / (fan_in ** 0.5)
        w = jax.random.normal(keys[idx], (cout, cin, k, k), jnp.float32) * std
        # (Cout,Cin,KH,KW) -> (KH,KW,Cin,Cout) -> (KH*KW*Cin, Cout): matches im2col ordering.
        w_mat = jnp.transpose(w, (2, 3, 1, 0)).reshape(k * k * cin, cout)
        conv_params.append(dict(
            w=w_mat,
            b=jnp.zeros((cout,), jnp.float32),                 # conv bias zeroed
            gamma=jnp.ones((cout,), jnp.float32),              # BN affine defaults
            beta=jnp.zeros((cout,), jnp.float32)))
    bound = 1.0 / (64 ** 0.5)                                  # Linear(64,1) default init
    w_lin = jax.random.uniform(keys[-2], (64,), jnp.float32, -bound, bound)
    b_lin = jax.random.uniform(keys[-1], (), jnp.float32, -bound, bound)
    return conv_params, w_lin, b_lin


# ---------------------------------------------------------------------------
# Forward pass
# ---------------------------------------------------------------------------
def cough_classifier_forward(x_nchw, conv_params, w_lin, b_lin):
    x = jnp.transpose(x_nchw, (0, 2, 3, 1)).astype(jnp.float32)    # NCHW -> NHWC
    n = x.shape[0]
    scale = shift = None     # previous layer's BN affine (training-mode batch stats)
    cout = None

    for (cin, cout, k, stride, pad), p in zip(LAYER_DEFS, conv_params):
        w_mat, bias = p["w"], p["b"]
        if scale is None:
            border = None                                   # layer 1: plain zero padding
        else:
            # Fold previous BN (a = y*scale + shift) into this conv:
            #   conv(pad0(a)) == conv'(pad_v(y)) with W'[tap,ci,:] = W[tap,ci,:]*scale[ci],
            #   b' = b + sum_tap shift@W, and border value v = -shift/scale (maps to 0).
            scale_rep = jnp.tile(scale, k * k)              # column order is tap-major, ci-minor
            shift_rep = jnp.tile(shift, k * k)
            bias = bias + shift_rep @ w_mat
            w_mat = w_mat * scale_rep[:, None]
            border = -shift / scale                         # gamma=1 by default -> scale != 0

        kdim = k * k * cin
        w_pad = jnp.zeros((kdim, COUT_PAD), jnp.float32).at[:, :cout].set(w_mat)
        b_pad = jnp.zeros((1, COUT_PAD), jnp.float32).at[:, :cout].set(bias)

        patches, ho, wo = im2col(x, k, k, stride, pad, border)
        rows = n * ho * wo
        y, stats = conv_block(patches, w_pad, b_pad, rows)

        # Exact training-mode BN statistics of this layer's post-ReLU output (biased var).
        s = jnp.sum(stats, axis=0)                          # (8, 128): row0 sum, row1 sumsq
        mean = s[0, :cout] / rows
        var = jnp.maximum(s[1, :cout] / rows - mean * mean, 0.0)
        scale = p["gamma"] * jax.lax.rsqrt(var + BN_EPS)
        shift = p["beta"] - mean * scale

        # Raw (pre-BN) activations, real channels only, kept in bf16 for the next layer.
        x = y[:rows, :cout].reshape(n, ho, wo, cout)

    # Head: AdaptiveAvgPool2d(1) + Linear(64 -> 1) + flatten, with layer-4 BN folded in.
    w_head = (scale * w_lin).reshape(1, cout)
    b_head = (b_lin + jnp.dot(shift, w_lin)).reshape(1, 1)
    out = head(x.reshape(n, -1, cout), w_head, b_head)      # (N, 1)
    return out.reshape(-1)


if __name__ == "__main__":
    key = jax.random.PRNGKey(0)
    pkey, xkey = jax.random.split(key)
    conv_params, w_lin, b_lin = make_params(pkey)

    # Small deterministic input: batch=2, channels=2 (required by conv1), 16x16 spatial.
    x = jax.random.normal(xkey, (2, 2, 16, 16), jnp.float32)

    fwd = jax.jit(cough_classifier_forward)
    out = fwd(x, conv_params, w_lin, b_lin)
    jax.block_until_ready(out)
    assert out.shape == (2,), out.shape
    assert bool(jnp.all(jnp.isfinite(out))), out
    print("KERNEL_OK")
</pallas_src>

<mosaic_0001>
module attributes {stable_mosaic.version = 11 : i64} {
  func.func @conv_block_kernel(%arg0: i32, %arg1: memref<128x50xbf16, #tpu.memory_space<vmem>>, %arg2: memref<50x128xbf16, #tpu.memory_space<vmem>>, %arg3: memref<1x128xf32, #tpu.memory_space<vmem>>, %arg4: memref<128x128xbf16, #tpu.memory_space<vmem>>, %arg5: memref<8x128xf32, #tpu.memory_space<vmem>>) attributes {dimension_semantics = [#tpu.dimension_semantics<parallel>], iteration_bounds = array<i64: 1>, scalar_prefetch = 0 : i64, scratch_operands = 0 : i64, tpu.core_type = #tpu.core_type<tc>, window_params = [{transform_indices = @transform_0, window_bounds = array<i64: 128, 50>}, {pipeline_mode = #tpu.pipeline_mode<synchronous>, transform_indices = @transform_1, window_bounds = array<i64: 50, 128>}, {pipeline_mode = #tpu.pipeline_mode<synchronous>, transform_indices = @transform_2, window_bounds = array<i64: 1, 128>}, {transform_indices = @transform_3, window_bounds = array<i64: 128, 128>}, {transform_indices = @transform_4, window_bounds = array<i64: 8, 128>}]} {
    %c0 = arith.constant 0 : index
    %c0_0 = arith.constant 0 : index
    %0 = vector.load %arg1[%c0, %c0_0] : memref<128x50xbf16, #tpu.memory_space<vmem>>, vector<128x50xbf16>
    %c0_1 = arith.constant 0 : index
    %c0_2 = arith.constant 0 : index
    %1 = vector.load %arg2[%c0_1, %c0_2] : memref<50x128xbf16, #tpu.memory_space<vmem>>, vector<50x128xbf16>
    %cst = arith.constant dense<0.000000e+00> : vector<128x128xf32>
    %2 = tpu.matmul %0, %1, %cst {dimension_numbers = #tpu.dot_dimension_numbers<[1], [0], [0], [1], [0, 0, 1, 1], [], []>} : vector<128x50xbf16>, vector<50x128xbf16>, vector<128x128xf32> -> vector<128x128xf32>
    %c0_3 = arith.constant 0 : index
    %c0_4 = arith.constant 0 : index
    %3 = vector.load %arg3[%c0_3, %c0_4] : memref<1x128xf32, #tpu.memory_space<vmem>>, vector<1x128xf32>
    %4 = vector.broadcast %3 : vector<1x128xf32> to vector<128x128xf32>
    %5 = arith.addf %2, %4 : vector<128x128xf32>
    %cst_5 = arith.constant 0.000000e+00 : f32
    %6 = vector.broadcast %cst_5 : f32 to vector<128x128xf32>
    %7 = arith.maximumf %5, %6 : vector<128x128xf32>
    %cst_6 = arith.constant dense<0.000000e+00> : vector<128xf32>
    %8 = vector.multi_reduction <add>, %7, %cst_6 [0] : vector<128x128xf32> to vector<128xf32>
    %9 = vector.shape_cast %8 : vector<128xf32> to vector<1x128xf32>
    %10 = arith.mulf %7, %7 : vector<128x128xf32>
    %cst_7 = arith.constant dense<0.000000e+00> : vector<128xf32>
    %11 = vector.multi_reduction <add>, %10, %cst_7 [0] : vector<128x128xf32> to vector<128xf32>
    %12 = vector.shape_cast %11 : vector<128xf32> to vector<1x128xf32>
    %13 = tpu.iota {dimensions = array<i32: 0>} : vector<8x128xi32>
    %c0_i32 = arith.constant 0 : i32
    %14 = vector.broadcast %c0_i32 : i32 to vector<8x128xi32>
    %15 = arith.cmpi eq, %13, %14 : vector<8x128xi32>
    %c1_i32 = arith.constant 1 : i32
    %16 = vector.broadcast %c1_i32 : i32 to vector<8x128xi32>
    %17 = arith.cmpi eq, %13, %16 : vector<8x128xi32>
    %cst_8 = arith.constant 0.000000e+00 : f32
    %18 = vector.shape_cast %12 : vector<1x128xf32> to vector<1x128xf32>
    %19 = vector.broadcast %18 : vector<1x128xf32> to vector<8x128xf32>
    %20 = vector.broadcast %cst_8 : f32 to vector<8x128xf32>
    %21 = arith.select %17, %19, %20 : vector<8x128xi1>, vector<8x128xf32>
    %22 = vector.shape_cast %9 : vector<1x128xf32> to vector<1x128xf32>
    %23 = vector.broadcast %22 : vector<1x128xf32> to vector<8x128xf32>
    %24 = arith.select %15, %23, %21 : vector<8x128xi1>, vector<8x128xf32>
    %c0_9 = arith.constant 0 : index
    %c0_10 = arith.constant 0 : index
    %25 = vector.load %arg5[%c0_9, %c0_10] : memref<8x128xf32, #tpu.memory_space<vmem>>, vector<8x128xf32>
    tpu.vector_store %arg5[%c0_9, %c0_10], %24 {strides = array<i32>} : memref<8x128xf32, #tpu.memory_space<vmem>>, vector<8x128xf32>,
    %26 = arith.truncf %7 : vector<128x128xf32> to vector<128x128xbf16>
    %c0_11 = arith.constant 0 : index
    %c0_12 = arith.constant 0 : index
    %27 = vector.load %arg4[%c0_11, %c0_12] : memref<128x128xbf16, #tpu.memory_space<vmem>>, vector<128x128xbf16>
    tpu.vector_store %arg4[%c0_11, %c0_12], %26 {strides = array<i32>} : memref<128x128xbf16, #tpu.memory_space<vmem>>, vector<128x128xbf16>,
    return
  }
  func.func @transform_0(%arg0: i32) -> (i32, i32) {
    %c0_i32 = arith.constant 0 : i32
    %c0_i32_0 = arith.constant 0 : i32
    return %arg0, %c0_i32 : i32, i32
  }
  func.func @transform_1(%arg0: i32) -> (i32, i32) {
    %c0_i32 = arith.constant 0 : i32
    %c0_i32_0 = arith.constant 0 : i32
    %c0_i32_1 = arith.constant 0 : i32
    return %c0_i32, %c0_i32_0 : i32, i32
  }
  func.func @transform_2(%arg0: i32) -> (i32, i32) {
    %c0_i32 = arith.constant 0 : i32
    %c0_i32_0 = arith.constant 0 : i32
    %c0_i32_1 = arith.constant 0 : i32
    return %c0_i32, %c0_i32_0 : i32, i32
  }
  func.func @transform_3(%arg0: i32) -> (i32, i32) {
    %c0_i32 = arith.constant 0 : i32
    %c0_i32_0 = arith.constant 0 : i32
    return %arg0, %c0_i32 : i32, i32
  }
  func.func @transform_4(%arg0: i32) -> (i32, i32) {
    %c0_i32 = arith.constant 0 : i32
    %c0_i32_0 = arith.constant 0 : i32
    return %arg0, %c0_i32 : i32, i32
  }
}

module attributes {stable_mosaic.version = 11 : i64} {
  func.func @conv_block_kernel(%arg0: i32, %arg1: memref<32x72xbf16, #tpu.memory_space<vmem>>, %arg2: memref<72x128xbf16, #tpu.memory_space<vmem>>, %arg3: memref<1x128xf32, #tpu.memory_space<vmem>>, %arg4: memref<32x128xbf16, #tpu.memory_space<vmem>>, %arg5: memref<8x128xf32, #tpu.memory_space<vmem>>) attributes {dimension_semantics = [#tpu.dimension_semantics<parallel>], iteration_bounds = array<i64: 1>, scalar_prefetch = 0 : i64, scratch_operands = 0 : i64, tpu.core_type = #tpu.core_type<tc>, window_params = [{transform_indices = @transform_0, window_bounds = array<i64: 32, 72>}, {pipeline_mode = #tpu.pipeline_mode<synchronous>, transform_indices = @transform_1, window_bounds = array<i64: 72, 128>}, {pipeline_mode = #tpu.pipeline_mode<synchronous>, transform_indices = @transform_2, window_bounds = array<i64: 1, 128>}, {transform_indices = @transform_3, window_bounds = array<i64: 32, 128>}, {transform_indices = @transform_4, window_bounds = array<i64: 8, 128>}]} {
    %c0 = arith.constant 0 : index
    %c0_0 = arith.constant 0 : index
    %0 = vector.load %arg1[%c0, %c0_0] : memref<32x72xbf16, #tpu.memory_space<vmem>>, vector<32x72xbf16>
    %c0_1 = arith.constant 0 : index
    %c0_2 = arith.constant 0 : index
    %1 = vector.load %arg2[%c0_1, %c0_2] : memref<72x128xbf16, #tpu.memory_space<vmem>>, vector<72x128xbf16>
    %cst = arith.constant dense<0.000000e+00> : vector<32x128xf32>
    %2 = tpu.matmul %0, %1, %cst {dimension_numbers = #tpu.dot_dimension_numbers<[1], [0], [0], [1], [0, 0, 1, 1], [], []>} : vector<32x72xbf16>, vector<72x128xbf16>, vector<32x128xf32> -> vector<32x128xf32>
    %c0_3 = arith.constant 0 : index
    %c0_4 = arith.constant 0 : index
    %3 = vector.load %arg3[%c0_3, %c0_4] : memref<1x128xf32, #tpu.memory_space<vmem>>, vector<1x128xf32>
    %4 = vector.broadcast %3 : vector<1x128xf32> to vector<32x128xf32>
    %5 = arith.addf %2, %4 : vector<32x128xf32>
    %cst_5 = arith.constant 0.000000e+00 : f32
    %6 = vector.broadcast %cst_5 : f32 to vector<32x128xf32>
    %7 = arith.maximumf %5, %6 : vector<32x128xf32>
    %cst_6 = arith.constant dense<0.000000e+00> : vector<128xf32>
    %8 = vector.multi_reduction <add>, %7, %cst_6 [0] : vector<32x128xf32> to vector<128xf32>
    %9 = vector.shape_cast %8 : vector<128xf32> to vector<1x128xf32>
    %10 = arith.mulf %7, %7 : vector<32x128xf32>
    %cst_7 = arith.constant dense<0.000000e+00> : vector<128xf32>
    %11 = vector.multi_reduction <add>, %10, %cst_7 [0] : vector<32x128xf32> to vector<128xf32>
    %12 = vector.shape_cast %11 : vector<128xf32> to vector<1x128xf32>
    %13 = tpu.iota {dimensions = array<i32: 0>} : vector<8x128xi32>
    %c0_i32 = arith.constant 0 : i32
    %14 = vector.broadcast %c0_i32 : i32 to vector<8x128xi32>
    %15 = arith.cmpi eq, %13, %14 : vector<8x128xi32>
    %c1_i32 = arith.constant 1 : i32
    %16 = vector.broadcast %c1_i32 : i32 to vector<8x128xi32>
    %17 = arith.cmpi eq, %13, %16 : vector<8x128xi32>
    %cst_8 = arith.constant 0.000000e+00 : f32
    %18 = vector.shape_cast %12 : vector<1x128xf32> to vector<1x128xf32>
    %19 = vector.broadcast %18 : vector<1x128xf32> to vector<8x128xf32>
    %20 = vector.broadcast %cst_8 : f32 to vector<8x128xf32>
    %21 = arith.select %17, %19, %20 : vector<8x128xi1>, vector<8x128xf32>
    %22 = vector.shape_cast %9 : vector<1x128xf32> to vector<1x128xf32>
    %23 = vector.broadcast %22 : vector<1x128xf32> to vector<8x128xf32>
    %24 = arith.select %15, %23, %21 : vector<8x128xi1>, vector<8x128xf32>
    %c0_9 = arith.constant 0 : index
    %c0_10 = arith.constant 0 : index
    %25 = vector.load %arg5[%c0_9, %c0_10] : memref<8x128xf32, #tpu.memory_space<vmem>>, vector<8x128xf32>
    tpu.vector_store %arg5[%c0_9, %c0_10], %24 {strides = array<i32>} : memref<8x128xf32, #tpu.memory_space<vmem>>, vector<8x128xf32>,
    %26 = arith.truncf %7 : vector<32x128xf32> to vector<32x128xbf16>
    %c0_11 = arith.constant 0 : index
    %c0_12 = arith.constant 0 : index
    %27 = vector.load %arg4[%c0_11, %c0_12] : memref<32x128xbf16, #tpu.memory_space<vmem>>, vector<32x128xbf16>
    tpu.vector_store %arg4[%c0_11, %c0_12], %26 {strides = array<i32>} : memref<32x128xbf16, #tpu.memory_space<vmem>>, vector<32x128xbf16>,
    return
  }
  func.func @transform_0(%arg0: i32) -> (i32, i32) {
    %c0_i32 = arith.constant 0 : i32
    %c0_i32_0 = arith.constant 0 : i32
    return %arg0, %c0_i32 : i32, i32
  }
  func.func @transform_1(%arg0: i32) -> (i32, i32) {
    %c0_i32 = arith.constant 0 : i32
    %c0_i32_0 = arith.constant 0 : i32
    %c0_i32_1 = arith.constant 0 : i32
    return %c0_i32, %c0_i32_0 : i32, i32
  }
  func.func @transform_2(%arg0: i32) -> (i32, i32) {
    %c0_i32 = arith.constant 0 : i32
    %c0_i32_0 = arith.constant 0 : i32
    %c0_i32_1 = arith.constant 0 : i32
    return %c0_i32, %c0_i32_0 : i32, i32
  }
  func.func @transform_3(%arg0: i32) -> (i32, i32) {
    %c0_i32 = arith.constant 0 : i32
    %c0_i32_0 = arith.constant 0 : i32
    return %arg0, %c0_i32 : i32, i32
  }
  func.func @transform_4(%arg0: i32) -> (i32, i32) {
    %c0_i32 = arith.constant 0 : i32
    %c0_i32_0 = arith.constant 0 : i32
    return %arg0, %c0_i32 : i32, i32
  }
}

module attributes {stable_mosaic.version = 11 : i64} {
  func.func @conv_block_kernel(%arg0: i32, %arg1: memref<8x144xbf16, #tpu.memory_space<vmem>>, %arg2: memref<144x128xbf16, #tpu.memory_space<vmem>>, %arg3: memref<1x128xf32, #tpu.memory_space<vmem>>, %arg4: memref<8x128xbf16, #tpu.memory_space<vmem>>, %arg5: memref<8x128xf32, #tpu.memory_space<vmem>>) attributes {dimension_semantics = [#tpu.dimension_semantics<parallel>], iteration_bounds = array<i64: 1>, scalar_prefetch = 0 : i64, scratch_operands = 0 : i64, tpu.core_type = #tpu.core_type<tc>, window_params = [{transform_indices = @transform_0, window_bounds = array<i64: 8, 144>}, {pipeline_mode = #tpu.pipeline_mode<synchronous>, transform_indices = @transform_1, window_bounds = array<i64: 144, 128>}, {pipeline_mode = #tpu.pipeline_mode<synchronous>, transform_indices = @transform_2, window_bounds = array<i64: 1, 128>}, {transform_indices = @transform_3, window_bounds = array<i64: 8, 128>}, {transform_indices = @transform_4, window_bounds = array<i64: 8, 128>}]} {
    %c0 = arith.constant 0 : index
    %c0_0 = arith.constant 0 : index
    %0 = vector.load %arg1[%c0, %c0_0] : memref<8x144xbf16, #tpu.memory_space<vmem>>, vector<8x144xbf16>
    %c0_1 = arith.constant 0 : index
    %c0_2 = arith.constant 0 : index
    %1 = vector.load %arg2[%c0_1, %c0_2] : memref<144x128xbf16, #tpu.memory_space<vmem>>, vector<144x128xbf16>
    %cst = arith.constant dense<0.000000e+00> : vector<8x128xf32>
    %2 = tpu.matmul %0, %1, %cst {dimension_numbers = #tpu.dot_dimension_numbers<[1], [0], [0], [1], [0, 0, 1, 1], [], []>} : vector<8x144xbf16>, vector<144x128xbf16>, vector<8x128xf32> -> vector<8x128xf32>
    %c0_3 = arith.constant 0 : index
    %c0_4 = arith.constant 0 : index
    %3 = vector.load %arg3[%c0_3, %c0_4] : memref<1x128xf32, #tpu.memory_space<vmem>>, vector<1x128xf32>
    %4 = vector.broadcast %3 : vector<1x128xf32> to vector<8x128xf32>
    %5 = arith.addf %2, %4 : vector<8x128xf32>
    %cst_5 = arith.constant 0.000000e+00 : f32
    %6 = vector.broadcast %cst_5 : f32 to vector<8x128xf32>
    %7 = arith.maximumf %5, %6 : vector<8x128xf32>
    %cst_6 = arith.constant dense<0.000000e+00> : vector<128xf32>
    %8 = vector.multi_reduction <add>, %7, %cst_6 [0] : vector<8x128xf32> to vector<128xf32>
    %9 = vector.shape_cast %8 : vector<128xf32> to vector<1x128xf32>
    %10 = arith.mulf %7, %7 : vector<8x128xf32>
    %cst_7 = arith.constant dense<0.000000e+00> : vector<128xf32>
    %11 = vector.multi_reduction <add>, %10, %cst_7 [0] : vector<8x128xf32> to vector<128xf32>
    %12 = vector.shape_cast %11 : vector<128xf32> to vector<1x128xf32>
    %13 = tpu.iota {dimensions = array<i32: 0>} : vector<8x128xi32>
    %c0_i32 = arith.constant 0 : i32
    %14 = vector.broadcast %c0_i32 : i32 to vector<8x128xi32>
    %15 = arith.cmpi eq, %13, %14 : vector<8x128xi32>
    %c1_i32 = arith.constant 1 : i32
    %16 = vector.broadcast %c1_i32 : i32 to vector<8x128xi32>
    %17 = arith.cmpi eq, %13, %16 : vector<8x128xi32>
    %cst_8 = arith.constant 0.000000e+00 : f32
    %18 = vector.shape_cast %12 : vector<1x128xf32> to vector<1x128xf32>
    %19 = vector.broadcast %18 : vector<1x128xf32> to vector<8x128xf32>
    %20 = vector.broadcast %cst_8 : f32 to vector<8x128xf32>
    %21 = arith.select %17, %19, %20 : vector<8x128xi1>, vector<8x128xf32>
    %22 = vector.shape_cast %9 : vector<1x128xf32> to vector<1x128xf32>
    %23 = vector.broadcast %22 : vector<1x128xf32> to vector<8x128xf32>
    %24 = arith.select %15, %23, %21 : vector<8x128xi1>, vector<8x128xf32>
    %c0_9 = arith.constant 0 : index
    %c0_10 = arith.constant 0 : index
    %25 = vector.load %arg5[%c0_9, %c0_10] : memref<8x128xf32, #tpu.memory_space<vmem>>, vector<8x128xf32>
    tpu.vector_store %arg5[%c0_9, %c0_10], %24 {strides = array<i32>} : memref<8x128xf32, #tpu.memory_space<vmem>>, vector<8x128xf32>,
    %26 = arith.truncf %7 : vector<8x128xf32> to vector<8x128xbf16>
    %c0_11 = arith.constant 0 : index
    %c0_12 = arith.constant 0 : index
    %27 = vector.load %arg4[%c0_11, %c0_12] : memref<8x128xbf16, #tpu.memory_space<vmem>>, vector<8x128xbf16>
    tpu.vector_store %arg4[%c0_11, %c0_12], %26 {strides = array<i32>} : memref<8x128xbf16, #tpu.memory_space<vmem>>, vector<8x128xbf16>,
    return
  }
  func.func @transform_0(%arg0: i32) -> (i32, i32) {
    %c0_i32 = arith.constant 0 : i32
    %c0_i32_0 = arith.constant 0 : i32
    return %arg0, %c0_i32 : i32, i32
  }
  func.func @transform_1(%arg0: i32) -> (i32, i32) {
    %c0_i32 = arith.constant 0 : i32
    %c0_i32_0 = arith.constant 0 : i32
    %c0_i32_1 = arith.constant 0 : i32
    return %c0_i32, %c0_i32_0 : i32, i32
  }
  func.func @transform_2(%arg0: i32) -> (i32, i32) {
    %c0_i32 = arith.constant 0 : i32
    %c0_i32_0 = arith.constant 0 : i32
    %c0_i32_1 = arith.constant 0 : i32
    return %c0_i32, %c0_i32_0 : i32, i32
  }
  func.func @transform_3(%arg0: i32) -> (i32, i32) {
    %c0_i32 = arith.constant 0 : i32
    %c0_i32_0 = arith.constant 0 : i32
    return %arg0, %c0_i32 : i32, i32
  }
  func.func @transform_4(%arg0: i32) -> (i32, i32) {
    %c0_i32 = arith.constant 0 : i32
    %c0_i32_0 = arith.constant 0 : i32
    return %arg0, %c0_i32 : i32, i32
  }
}

module attributes {stable_mosaic.version = 11 : i64} {
  func.func @head_kernel(%arg0: memref<2x1x64xbf16, #tpu.memory_space<vmem>>, %arg1: memref<1x64xf32, #tpu.memory_space<vmem>>, %arg2: memref<1x1xf32, #tpu.memory_space<vmem>>, %arg3: memref<2x1xf32, #tpu.memory_space<vmem>>) attributes {dimension_semantics = [], scalar_prefetch = 0 : i64, scratch_operands = 0 : i64, tpu.core_type = #tpu.core_type<tc>} {
    %c0 = arith.constant 0 : index
    %c0_0 = arith.constant 0 : index
    %c0_1 = arith.constant 0 : index
    %0 = vector.load %arg0[%c0, %c0_0, %c0_1] : memref<2x1x64xbf16, #tpu.memory_space<vmem>>, vector<2x1x64xbf16>
    %1 = arith.extf %0 : vector<2x1x64xbf16> to vector<2x1x64xf32>
    %cst = arith.constant dense<0.000000e+00> : vector<2x64xf32>
    %2 = vector.multi_reduction <add>, %1, %cst [1] : vector<2x1x64xf32> to vector<2x64xf32>
    %cst_2 = arith.constant 1.000000e+00 : f32
    %3 = vector.broadcast %cst_2 : f32 to vector<2x64xf32>
    %4 = arith.divf %2, %3 : vector<2x64xf32>
    %c0_3 = arith.constant 0 : index
    %c0_4 = arith.constant 0 : index
    %5 = vector.load %arg1[%c0_3, %c0_4] : memref<1x64xf32, #tpu.memory_space<vmem>>, vector<1x64xf32>
    %6 = vector.broadcast %5 : vector<1x64xf32> to vector<2x64xf32>
    %7 = arith.mulf %4, %6 : vector<2x64xf32>
    %cst_5 = arith.constant dense<0.000000e+00> : vector<2xf32>
    %8 = vector.multi_reduction <add>, %7, %cst_5 [1] : vector<2x64xf32> to vector<2xf32>
    %9 = vector.shape_cast %8 : vector<2xf32> to vector<2x1xf32>
    %c0_6 = arith.constant 0 : index
    %c0_7 = arith.constant 0 : index
    %10 = vector.load %arg2[%c0_6, %c0_7] : memref<1x1xf32, #tpu.memory_space<vmem>>, vector<1x1xf32>
    %11 = vector.broadcast %10 : vector<1x1xf32> to vector<2x1xf32>
    %12 = arith.addf %9, %11 : vector<2x1xf32>
    %c0_8 = arith.constant 0 : index
    %c0_9 = arith.constant 0 : index
    %13 = vector.load %arg3[%c0_8, %c0_9] : memref<2x1xf32, #tpu.memory_space<vmem>>, vector<2x1xf32>
    tpu.vector_store %arg3[%c0_8, %c0_9], %12 {strides = array<i32>} : memref<2x1xf32, #tpu.memory_space<vmem>>, vector<2x1xf32>,
    return
  }
}

module attributes {stable_mosaic.version = 11 : i64} {
  func.func @conv_block_kernel(%arg0: i32, %arg1: memref<8x288xbf16, #tpu.memory_space<vmem>>, %arg2: memref<288x128xbf16, #tpu.memory_space<vmem>>, %arg3: memref<1x128xf32, #tpu.memory_space<vmem>>, %arg4: memref<8x128xbf16, #tpu.memory_space<vmem>>, %arg5: memref<8x128xf32, #tpu.memory_space<vmem>>) attributes {dimension_semantics = [#tpu.dimension_semantics<parallel>], iteration_bounds = array<i64: 1>, scalar_prefetch = 0 : i64, scratch_operands = 0 : i64, tpu.core_type = #tpu.core_type<tc>, window_params = [{transform_indices = @transform_0, window_bounds = array<i64: 8, 288>}, {pipeline_mode = #tpu.pipeline_mode<synchronous>, transform_indices = @transform_1, window_bounds = array<i64: 288, 128>}, {pipeline_mode = #tpu.pipeline_mode<synchronous>, transform_indices = @transform_2, window_bounds = array<i64: 1, 128>}, {transform_indices = @transform_3, window_bounds = array<i64: 8, 128>}, {transform_indices = @transform_4, window_bounds = array<i64: 8, 128>}]} {
    %c0 = arith.constant 0 : index
    %c0_0 = arith.constant 0 : index
    %0 = vector.load %arg1[%c0, %c0_0] : memref<8x288xbf16, #tpu.memory_space<vmem>>, vector<8x288xbf16>
    %c0_1 = arith.constant 0 : index
    %c0_2 = arith.constant 0 : index
    %1 = vector.load %arg2[%c0_1, %c0_2] : memref<288x128xbf16, #tpu.memory_space<vmem>>, vector<288x128xbf16>
    %cst = arith.constant dense<0.000000e+00> : vector<8x128xf32>
    %2 = tpu.matmul %0, %1, %cst {dimension_numbers = #tpu.dot_dimension_numbers<[1], [0], [0], [1], [0, 0, 1, 1], [], []>} : vector<8x288xbf16>, vector<288x128xbf16>, vector<8x128xf32> -> vector<8x128xf32>
    %c0_3 = arith.constant 0 : index
    %c0_4 = arith.constant 0 : index
    %3 = vector.load %arg3[%c0_3, %c0_4] : memref<1x128xf32, #tpu.memory_space<vmem>>, vector<1x128xf32>
    %4 = vector.broadcast %3 : vector<1x128xf32> to vector<8x128xf32>
    %5 = arith.addf %2, %4 : vector<8x128xf32>
    %cst_5 = arith.constant 0.000000e+00 : f32
    %6 = vector.broadcast %cst_5 : f32 to vector<8x128xf32>
    %7 = arith.maximumf %5, %6 : vector<8x128xf32>
    %c8_i32 = arith.constant 8 : i32
    %8 = arith.muli %arg0, %c8_i32 : i32
    %9 = tpu.iota {dimensions = array<i32: 0>} : vector<8x1xi32>
    %10 = vector.broadcast %8 : i32 to vector<8x1xi32>
    %11 = arith.addi %10, %9 : vector<8x1xi32>
    %c2_i32 = arith.constant 2 : i32
    %12 = vector.broadcast %c2_i32 : i32 to vector<8x1xi32>
    %13 = arith.cmpi slt, %11, %12 : vector<8x1xi32>
    %cst_6 = arith.constant 0.000000e+00 : f32
    %14 = vector.shape_cast %13 : vector<8x1xi1> to vector<8x1xi1>
    %15 = vector.broadcast %14 : vector<8x1xi1> to vector<8x128xi1>
    %16 = vector.broadcast %cst_6 : f32 to vector<8x128xf32>
    %17 = arith.select %15, %7, %16 : vector<8x128xi1>, vector<8x128xf32>
    %cst_7 = arith.constant dense<0.000000e+00> : vector<128xf32>
    %18 = vector.multi_reduction <add>, %17, %cst_7 [0] : vector<8x128xf32> to vector<128xf32>
    %19 = vector.shape_cast %18 : vector<128xf32> to vector<1x128xf32>
    %20 = arith.mulf %17, %7 : vector<8x128xf32>
    %cst_8 = arith.constant dense<0.000000e+00> : vector<128xf32>
    %21 = vector.multi_reduction <add>, %20, %cst_8 [0] : vector<8x128xf32> to vector<128xf32>
    %22 = vector.shape_cast %21 : vector<128xf32> to vector<1x128xf32>
    %23 = tpu.iota {dimensions = array<i32: 0>} : vector<8x128xi32>
    %c0_i32 = arith.constant 0 : i32
    %24 = vector.broadcast %c0_i32 : i32 to vector<8x128xi32>
    %25 = arith.cmpi eq, %23, %24 : vector<8x128xi32>
    %c1_i32 = arith.constant 1 : i32
    %26 = vector.broadcast %c1_i32 : i32 to vector<8x128xi32>
    %27 = arith.cmpi eq, %23, %26 : vector<8x128xi32>
    %cst_9 = arith.constant 0.000000e+00 : f32
    %28 = vector.shape_cast %22 : vector<1x128xf32> to vector<1x128xf32>
    %29 = vector.broadcast %28 : vector<1x128xf32> to vector<8x128xf32>
    %30 = vector.broadcast %cst_9 : f32 to vector<8x128xf32>
    %31 = arith.select %27, %29, %30 : vector<8x128xi1>, vector<8x128xf32>
    %32 = vector.shape_cast %19 : vector<1x128xf32> to vector<1x128xf32>
    %33 = vector.broadcast %32 : vector<1x128xf32> to vector<8x128xf32>
    %34 = arith.select %25, %33, %31 : vector<8x128xi1>, vector<8x128xf32>
    %c0_10 = arith.constant 0 : index
    %c0_11 = arith.constant 0 : index
    %35 = vector.load %arg5[%c0_10, %c0_11] : memref<8x128xf32, #tpu.memory_space<vmem>>, vector<8x128xf32>
    tpu.vector_store %arg5[%c0_10, %c0_11], %34 {strides = array<i32>} : memref<8x128xf32, #tpu.memory_space<vmem>>, vector<8x128xf32>,
    %36 = arith.truncf %7 : vector<8x128xf32> to vector<8x128xbf16>
    %c0_12 = arith.constant 0 : index
    %c0_13 = arith.constant 0 : index
    %37 = vector.load %arg4[%c0_12, %c0_13] : memref<8x128xbf16, #tpu.memory_space<vmem>>, vector<8x128xbf16>
    tpu.vector_store %arg4[%c0_12, %c0_13], %36 {strides = array<i32>} : memref<8x128xbf16, #tpu.memory_space<vmem>>, vector<8x128xbf16>,
    return
  }
  func.func @transform_0(%arg0: i32) -> (i32, i32) {
    %c0_i32 = arith.constant 0 : i32
    %c0_i32_0 = arith.constant 0 : i32
    return %arg0, %c0_i32 : i32, i32
  }
  func.func @transform_1(%arg0: i32) -> (i32, i32) {
    %c0_i32 = arith.constant 0 : i32
    %c0_i32_0 = arith.constant 0 : i32
    %c0_i32_1 = arith.constant 0 : i32
    return %c0_i32, %c0_i32_0 : i32, i32
  }
  func.func @transform_2(%arg0: i32) -> (i32, i32) {
    %c0_i32 = arith.constant 0 : i32
    %c0_i32_0 = arith.constant 0 : i32
    %c0_i32_1 = arith.constant 0 : i32
    return %c0_i32, %c0_i32_0 : i32, i32
  }
  func.func @transform_3(%arg0: i32) -> (i32, i32) {
    %c0_i32 = arith.constant 0 : i32
    %c0_i32_0 = arith.constant 0 : i32
    return %arg0, %c0_i32 : i32, i32
  }
  func.func @transform_4(%arg0: i32) -> (i32, i32) {
    %c0_i32 = arith.constant 0 : i32
    %c0_i32_0 = arith.constant 0 : i32
    return %arg0, %c0_i32 : i32, i32
  }
}

</mosaic_0001>

<llo_original>
// kernel: cough_classifier_forward.5
$region0: #{cough_classifier_forward.5}
  #allocation0 [shape = 'u32[]', space=smem, size = 0x4, offset = 0x4, fixed_abs, tag = 'smem constant byte address 0x4 - core index']
  #allocation1 [shape = 'u32[144,128]{1,0:T(1,128)}', space=vmem, size = 0x12000, scoped, tag = 'internal scratch']
  %s0 = inlined_call_operand.vmem [shape: bf16[128,50], index: 0, kind: input, shape index: {}]
  %s1 = inlined_call_operand.vmem [shape: bf16[50,128], index: 1, kind: input, shape index: {}]
  %s2 = inlined_call_operand.vmem [shape: f32[1,128], index: 2, kind: input, shape index: {}]
  %s3 = inlined_call_operand.vmem [shape: bf16[128,128], index: 3, kind: output, shape index: {0}]
  %s4 = inlined_call_operand.vmem [shape: f32[8,128], index: 4, kind: output, shape index: {1}]
  %5 = xla_tuple %s3, %s4
  %s6 = sld [smem:[#allocation0]]
  $region30: #{cough_classifier_forward.5} parent=0
    _
  %s8 = ssub.s32 1, %s6
  %s9 = scalar_select 0, %s8, %s6
  // Predicated region
  $region2: #{cough_classifier_forward.5} parent=0 // pred_check
    _
  $region3: #{cough_classifier_forward.5} parent=0 // pred_check_branch
    %11 = sbr.rel (0) target = $region5
  $region4: #{cough_classifier_forward.5} parent=0 // pred_region
    _
  $region5: #{cough_classifier_forward.5} parent=0 // pred_fallthru
    _
  // Predicated region
  $region6: #{cough_classifier_forward.5} parent=0 // pred_check
    _
  $region7: #{cough_classifier_forward.5} parent=0 // pred_check_branch
    %13 = sbr.rel (0) target = $region9
  $region8: #{cough_classifier_forward.5} parent=0 // pred_region
    _
  $region9: #{cough_classifier_forward.5} parent=0 // pred_fallthru
    _
  // Predicated region
  $region10: #{cough_classifier_forward.5} parent=0 // pred_check
    _
  $region11: #{cough_classifier_forward.5} parent=0 // pred_check_branch
    %15 = sbr.rel (0) target = $region13
  $region12: #{cough_classifier_forward.5} parent=0 // pred_region
    _
  $region13: #{cough_classifier_forward.5} parent=0 // pred_fallthru
    _
  %v17 = vld [vmem:[%s0] sm:$0xf]
  %v18 = vld [vmem:[%s0 + $0x4] sm:$0xf]
  %v19 = vld [vmem:[%s0 + $0x8] sm:$0xf]
  %v20 = vld [vmem:[%s0 + $0xc] sm:$0xf]
  %v21 = vld [vmem:[%s0 + $0x10] sm:$0xf]
  %v22 = vld [vmem:[%s0 + $0x14] sm:$0xf]
  %v23 = vld [vmem:[%s0 + $0x18] sm:$0xf]
  %v24 = vld [vmem:[%s0 + $0x1c] sm:$0xf]
  %v25 = vld [vmem:[%s0 + $0x20] sm:$0xf]
  %v26 = vld [vmem:[%s0 + $0x24] sm:$0xf]
  %v27 = vld [vmem:[%s0 + $0x28] sm:$0xf]
  %v28 = vld [vmem:[%s0 + $0x2c] sm:$0xf]
  %v29 = vld [vmem:[%s0 + $0x30] sm:$0xf]
  %v30 = vld [vmem:[%s0 + $0x34] sm:$0xf]
  %v31 = vld [vmem:[%s0 + $0x38] sm:$0xf]
  %v32 = vld [vmem:[%s0 + $0x3c] sm:$0xf]
  %v33 = vld [vmem:[%s1] sm:$0xf]
  %v34 = vld [vmem:[%s1 + $0x4] sm:$0xf]
  %v35 = vld [vmem:[%s1 + $0x8] sm:$0xf]
  %v36 = vld [vmem:[%s1 + $0xc] sm:$0xf]
  %v37 = vld [vmem:[%s1 + $0x10] sm:$0xf]
  %v38 = vld [vmem:[%s1 + $0x14] sm:$0xf]
  %v39 = vld [vmem:[%s1 + $0x18] sm:$0x1]
  %v40 = vld [vmem:[%s2] sm:$0x1]
  %v42 = vlaneseq
  %v43 = vshrl.u32 %v42, 7
  %v44 = vsub.s32 0, %v43
  %v45 = vrot.slane %v40, %v44
  %v63 = vunpack.c.l.b16 %v17
  %v64 = vunpack.c.l.b16 %v18
  %v65 = vunpack.c.l.b16 %v19
  %v66 = vunpack.c.l.b16 %v20
  %v67 = vunpack.c.l.b16 %v21
  %v68 = vunpack.c.l.b16 %v22
  %v69 = vunpack.c.l.b16 %v23
  %v70 = vunpack.c.l.b16 %v24
  %v71 = vunpack.c.l.b16 %v25
  %v72 = vunpack.c.l.b16 %v26
  %v73 = vunpack.c.l.b16 %v27
  %v74 = vunpack.c.l.b16 %v28
  %v75 = vunpack.c.l.b16 %v29
  %v76 = vunpack.c.l.b16 %v30
  %v77 = vunpack.c.l.b16 %v31
  %v78 = vunpack.c.l.b16 %v32
  %v79 = vpack.c.b16 %v64, %v63
  %v80 = vpack.c.b16 %v66, %v65
  %v81 = vpack.c.b16 %v68, %v67
  %v82 = vpack.c.b16 %v70, %v69
  %v83 = vpack.c.b16 %v72, %v71
  %v84 = vpack.c.b16 %v74, %v73
  %v85 = vpack.c.b16 %v76, %v75
  %v86 = vpack.c.b16 %v78, %v77
  %v94 = vunpack.c.l.b16 %v33
  %v95 = vunpack.c.l.b16 %v34
  %v96 = vunpack.c.l.b16 %v35
  %v97 = vunpack.c.l.b16 %v36
  %v98 = vunpack.c.l.b16 %v37
  %v99 = vunpack.c.l.b16 %v38
  %v100 = vunpack.c.l.b16 %v39
  %v101 = vpack.c.b16 %v95, %v94
  %v102 = vpack.c.b16 %v97, %v96
  %v103 = vpack.c.b16 %v99, %v98
  %v104 = vpack.c.b16 %v100, %v100
  %vm108 = vcmask 408576
  %v110 = vsel %vm108, %v79, 0
  %v113 = vsel %vm108, %v80, 0
  %v116 = vsel %vm108, %v81, 0
  %v119 = vsel %vm108, %v82, 0
  %v122 = vsel %vm108, %v83, 0
  %v125 = vsel %vm108, %v84, 0
  %v128 = vsel %vm108, %v85, 0
  %v131 = vsel %vm108, %v86, 0
  %vm133 = vcmask 1040384
  %v135 = vsel %vm133, %v104, 0
  %137 = vmatprep.subr.bf16.mxu0 0
  %138 = vmatpush1.bf16.msra.mxu0 0
  %139 = vmatprep.subr.bf16.mxu0 0
  %140 = vmatpush1.bf16.msra.mxu0 0
  %141 = vmatprep.subr.bf16.mxu0 0
  %142 = vmatpush1.bf16.msra.mxu0 0
  %143 = vmatprep.subr.bf16.mxu0 0
  %144 = vmatpush1.bf16.msra.mxu0 0
  %145 = vmatprep.subr.bf16.mxu0 0
  %146 = vmatpush1.bf16.msra.mxu0 %v135
  %147 = vmatprep.subr.bf16.mxu0 0
  %148 = vmatpush1.bf16.msra.mxu0 %v103
  %149 = vmatprep.subr.bf16.mxu0 0
  %150 = vmatpush1.bf16.msra.mxu0 %v102
  %151 = vmatprep.subr.bf16.mxu0 0
  %152 = vmatpush1.bf16.msra.mxu0 %v101
  %153 = vmatprep.subr.bf16.mxu0 0
  %154 = vmatpush2.bf16.msra.mxu0 0
  %155 = vmatprep.subr.bf16.mxu0 0
  %156 = vmatpush2.bf16.msra.mxu0 0
  %157 = vmatprep.subr.bf16.mxu0 0
  %158 = vmatpush2.bf16.msra.mxu0 0
  %159 = vmatprep.subr.bf16.mxu0 0
  %160 = vmatpush2.bf16.msra.mxu0 0
  %161 = vmatprep.subr.bf16.mxu0 0
  %162 = vmatpush2.bf16.msra.mxu0 0
  %163 = vmatprep.subr.bf16.mxu0 0
  %164 = vmatpush2.bf16.msra.mxu0 0
  %165 = vmatprep.subr.bf16.mxu0 0
  %166 = vmatpush2.bf16.msra.mxu0 0
  %167 = vmatprep.subr.bf16.mxu0 0
  %168 = vmatpush2.bf16.msra.mxu0 0
  %169 = vmatprep.mubr.bf16.mxu0 0
  %170 = vmatmul.mubr.bf16.gmra.mxu0 %v110
  %v171 = vpop.f32.mrf.mxu0
  %v172 = vadd.f32 %v45, %v171
  %v173 = vpop.f32.mrf.mxu0
  %v174 = vpop.f32.mrf.mxu0
  %v175 = vadd.f32 %v45, %v174
  %v176 = vpop.f32.mrf.mxu0
  %177 = vmatprep.mubr.bf16.mxu0 0
  %178 = vmatmul.mubr.bf16.gmra.mxu0 %v113
  %v179 = vpop.f32.mrf.mxu0
  %v180 = vadd.f32 %v45, %v179
  %v181 = vpop.f32.mrf.mxu0
  %v182 = vpop.f32.mrf.mxu0
  %v183 = vadd.f32 %v45, %v182
  %v184 = vpop.f32.mrf.mxu0
  %185 = vmatprep.mubr.bf16.mxu0 0
  %186 = vmatmul.mubr.bf16.gmra.mxu0 %v116
  %v187 = vpop.f32.mrf.mxu0
  %v188 = vadd.f32 %v45, %v187
  %v189 = vpop.f32.mrf.mxu0
  %v190 = vpop.f32.mrf.mxu0
  %v191 = vadd.f32 %v45, %v190
  %v192 = vpop.f32.mrf.mxu0
  %193 = vmatprep.mubr.bf16.mxu0 0
  %194 = vmatmul.mubr.bf16.gmra.mxu0 %v119
  %v195 = vpop.f32.mrf.mxu0
  %v196 = vadd.f32 %v45, %v195
  %v197 = vpop.f32.mrf.mxu0
  %v198 = vpop.f32.mrf.mxu0
  %v199 = vadd.f32 %v45, %v198
  %v200 = vpop.f32.mrf.mxu0
  %201 = vmatprep.mubr.bf16.mxu0 0
  %202 = vmatmul.mubr.bf16.gmra.mxu0 %v122
  %v203 = vpop.f32.mrf.mxu0
  %v204 = vadd.f32 %v45, %v203
  %v205 = vpop.f32.mrf.mxu0
  %v206 = vpop.f32.mrf.mxu0
  %v207 = vadd.f32 %v45, %v206
  %v208 = vpop.f32.mrf.mxu0
  %209 = vmatprep.mubr.bf16.mxu0 0
  %210 = vmatmul.mubr.bf16.gmra.mxu0 %v125
  %v211 = vpop.f32.mrf.mxu0
  %v212 = vadd.f32 %v45, %v211
  %v213 = vpop.f32.mrf.mxu0
  %v214 = vpop.f32.mrf.mxu0
  %v215 = vadd.f32 %v45, %v214
  %v216 = vpop.f32.mrf.mxu0
  %217 = vmatprep.mubr.bf16.mxu0 0
  %218 = vmatmul.mubr.bf16.gmra.mxu0 %v128
  %v219 = vpop.f32.mrf.mxu0
  %v220 = vadd.f32 %v45, %v219
  %v221 = vpop.f32.mrf.mxu0
  %v222 = vpop.f32.mrf.mxu0
  %v223 = vadd.f32 %v45, %v222
  %v224 = vpop.f32.mrf.mxu0
  %225 = vmatprep.mubr.bf16.mxu0 0
  %226 = vmatmul.mubr.bf16.gmra.mxu0 %v131
  %v227 = vpop.f32.mrf.mxu0
  %v228 = vadd.f32 %v45, %v227
  %v229 = vpop.f32.mrf.mxu0
  %v230 = vpop.f32.mrf.mxu0
  %v231 = vadd.f32 %v45, %v230
  %v232 = vpop.f32.mrf.mxu0
  %233 = vdwg.mxu0
  %v234 = vmax.f32 %v172, 0.0
  %v235 = vmax.f32 %v175, 0.0
  %v236 = vmax.f32 %v180, 0.0
  %v237 = vmax.f32 %v183, 0.0
  %v238 = vmax.f32 %v188, 0.0
  %v239 = vmax.f32 %v191, 0.0
  %v240 = vmax.f32 %v196, 0.0
  %v241 = vmax.f32 %v199, 0.0
  %v242 = vmax.f32 %v204, 0.0
  %v243 = vmax.f32 %v207, 0.0
  %v244 = vmax.f32 %v212, 0.0
  %v245 = vmax.f32 %v215, 0.0
  %v246 = vmax.f32 %v220, 0.0
  %v247 = vmax.f32 %v223, 0.0
  %v248 = vmax.f32 %v228, 0.0
  %v249 = vmax.f32 %v231, 0.0
  %v250 = vadd.f32 %v234, %v235
  %v251 = vadd.f32 %v250, %v236
  %v252 = vadd.f32 %v251, %v237
  %v253 = vadd.f32 %v252, %v238
  %v254 = vadd.f32 %v253, %v239
  %v255 = vadd.f32 %v254, %v240
  %v256 = vadd.f32 %v255, %v241
  %v257 = vadd.f32 %v256, %v242
  %v258 = vadd.f32 %v257, %v243
  %v259 = vadd.f32 %v258, %v244
  %v260 = vadd.f32 %v259, %v245
  %v261 = vadd.f32 %v260, %v246
  %v262 = vadd.f32 %v261, %v247
  %v263 = vadd.f32 %v262, %v248
  %v264 = vadd.f32 %v263, %v249
  %v265 = vrot.slane %v264, 4
  %v266 = vadd.f32 %v264, %v265
  %v267 = vrot.slane %v266, 2
  %v268 = vadd.f32 %v266, %v267
  %v269 = vrot.slane %v268, 1
  %v270 = vadd.f32 %v268, %v269
  %v271 = vmul.f32 %v234, %v234
  %v272 = vmul.f32 %v235, %v235
  %v273 = vmul.f32 %v236, %v236
  %v274 = vmul.f32 %v237, %v237
  %v275 = vmul.f32 %v238, %v238
  %v276 = vmul.f32 %v239, %v239
  %v277 = vmul.f32 %v240, %v240
  %v278 = vmul.f32 %v241, %v241
  %v279 = vmul.f32 %v242, %v242
  %v280 = vmul.f32 %v243, %v243
  %v281 = vmul.f32 %v244, %v244
  %v282 = vmul.f32 %v245, %v245
  %v283 = vmul.f32 %v246, %v246
  %v284 = vmul.f32 %v247, %v247
  %v285 = vmul.f32 %v248, %v248
  %v286 = vmul.f32 %v249, %v249
  %v287 = vadd.f32 %v271, %v272
  %v288 = vadd.f32 %v287, %v273
  %v289 = vadd.f32 %v288, %v274
  %v290 = vadd.f32 %v289, %v275
  %v291 = vadd.f32 %v290, %v276
  %v292 = vadd.f32 %v291, %v277
  %v293 = vadd.f32 %v292, %v278
  %v294 = vadd.f32 %v293, %v279
  %v295 = vadd.f32 %v294, %v280
  %v296 = vadd.f32 %v295, %v281
  %v297 = vadd.f32 %v296, %v282
  %v298 = vadd.f32 %v297, %v283
  %v299 = vadd.f32 %v298, %v284
  %v300 = vadd.f32 %v299, %v285
  %v301 = vadd.f32 %v300, %v286
  %v302 = vrot.slane %v301, 4
  %v303 = vadd.f32 %v301, %v302
  %v304 = vrot.slane %v303, 2
  %v305 = vadd.f32 %v303, %v304
  %v306 = vrot.slane %v305, 1
  %v307 = vadd.f32 %v305, %v306
  %v308 = vlaneseq
  %v309 = vshrl.u32 %v308, 7
  %vm310 = vcmp.eq.s32.totalorder %v309, 0
  %vm311 = vcmp.eq.s32.totalorder %v309, 1
  %v312 = vsel %vm311, %v307, 0.0
  %v313 = vsel %vm310, %v270, %v312
  %314 = vst [vmem:[%s4] sm:$0xff] %v313
  %v315 = vpack.c.bf16 %v235, %v234
  %v316 = vpack.c.bf16 %v237, %v236
  %v317 = vpack.c.bf16 %v239, %v238
  %v318 = vpack.c.bf16 %v241, %v240
  %v319 = vpack.c.bf16 %v243, %v242
  %v320 = vpack.c.bf16 %v245, %v244
  %v321 = vpack.c.bf16 %v247, %v246
  %v322 = vpack.c.bf16 %v249, %v248
  %v331 = vunpack.c.l.b16 %v315
  %v332 = vunpack.c.h.b16 %v315
  %v333 = vunpack.c.l.b16 %v316
  %v334 = vunpack.c.h.b16 %v316
  %v335 = vunpack.c.l.b16 %v317
  %v336 = vunpack.c.h.b16 %v317
  %v337 = vunpack.c.l.b16 %v318
  %v338 = vunpack.c.h.b16 %v318
  %v339 = vunpack.c.l.b16 %v319
  %v340 = vunpack.c.h.b16 %v319
  %v341 = vunpack.c.l.b16 %v320
  %v342 = vunpack.c.h.b16 %v320
  %v343 = vunpack.c.l.b16 %v321
  %v344 = vunpack.c.h.b16 %v321
  %v345 = vunpack.c.l.b16 %v322
  %v346 = vunpack.c.h.b16 %v322
  %v347 = vpack.c.b16 %v331, %v331
  %v348 = vpack.c.b16 %v332, %v332
  %v349 = vpack.c.b16 %v333, %v333
  %v350 = vpack.c.b16 %v334, %v334
  %v351 = vpack.c.b16 %v335, %v335
  %v352 = vpack.c.b16 %v336, %v336
  %v353 = vpack.c.b16 %v337, %v337
  %v354 = vpack.c.b16 %v338, %v338
  %v355 = vpack.c.b16 %v339, %v339
  %v356 = vpack.c.b16 %v340, %v340
  %v357 = vpack.c.b16 %v341, %v341
  %v358 = vpack.c.b16 %v342, %v342
  %v359 = vpack.c.b16 %v343, %v343
  %v360 = vpack.c.b16 %v344, %v344
  %v361 = vpack.c.b16 %v345, %v345
  %v362 = vpack.c.b16 %v346, %v346
  %379 = vst [vmem:[%s3] sm:$0xf] %v347
  %380 = vst [vmem:[%s3 + $0x4] sm:$0xf] %v348
  %381 = vst [vmem:[%s3 + $0x8] sm:$0xf] %v349
  %382 = vst [vmem:[%s3 + $0xc] sm:$0xf] %v350
  %383 = vst [vmem:[%s3 + $0x10] sm:$0xf] %v351
  %384 = vst [vmem:[%s3 + $0x14] sm:$0xf] %v352
  %385 = vst [vmem:[%s3 + $0x18] sm:$0xf] %v353
  %386 = vst [vmem:[%s3 + $0x1c] sm:$0xf] %v354
  %387 = vst [vmem:[%s3 + $0x20] sm:$0xf] %v355
  %388 = vst [vmem:[%s3 + $0x24] sm:$0xf] %v356
  %389 = vst [vmem:[%s3 + $0x28] sm:$0xf] %v357
  %390 = vst [vmem:[%s3 + $0x2c] sm:$0xf] %v358
  %391 = vst [vmem:[%s3 + $0x30] sm:$0xf] %v359
  %392 = vst [vmem:[%s3 + $0x34] sm:$0xf] %v360
  %393 = vst [vmem:[%s3 + $0x38] sm:$0xf] %v361
  %394 = vst [vmem:[%s3 + $0x3c] sm:$0xf] %v362
  // Predicated region
  $region14: #{cough_classifier_forward.5} parent=0 // pred_check
    _
  $region15: #{cough_classifier_forward.5} parent=0 // pred_check_branch
    %396 = sbr.rel (0) target = $region17
  $region16: #{cough_classifier_forward.5} parent=0 // pred_region
    _
  $region17: #{cough_classifier_forward.5} parent=0 // pred_fallthru
    _
  // Predicated region
  $region18: #{cough_classifier_forward.5} parent=0 // pred_check
    _
  $region19: #{cough_classifier_forward.5} parent=0 // pred_check_branch
    %398 = sbr.rel (0) target = $region21
  $region20: #{cough_classifier_forward.5} parent=0 // pred_region
    _
  $region21: #{cough_classifier_forward.5} parent=0 // pred_fallthru
    _
  // Predicated region
  $region22: #{cough_classifier_forward.5} parent=0 // pred_check
    _
  $region23: #{cough_classifier_forward.5} parent=0 // pred_check_branch
    %400 = sbr.rel (0) target = $region25
  $region24: #{cough_classifier_forward.5} parent=0 // pred_region
    _
  $region25: #{cough_classifier_forward.5} parent=0 // pred_fallthru
    _
  // Predicated region
  $region26: #{cough_classifier_forward.5} parent=0 // pred_check
    _
  $region27: #{cough_classifier_forward.5} parent=0 // pred_check_branch
    %402 = sbr.rel (0) target = $region29
  $region28: #{cough_classifier_forward.5} parent=0 // pred_region
    _
  $region29: #{cough_classifier_forward.5} parent=0 // pred_fallthru
    _

// kernel: tile.33
$region0: #{tile.33}
  #allocation0 [shape = 's32[1]{0}', space=sflag, size = 0x4, scoped, tag = 'scoped memory for tile.33']
  %s0 = inlined_call_operand.vmem [shape: f32[8], index: 0, kind: input, shape index: {}]
  %s1 = inlined_call_operand.vmem [shape: f32[9,8], index: 1, kind: output, shape index: {}]
  // Predicated region
  $region2: #{tile.33} parent=0 // pred_check
    _
  $region3: #{tile.33} parent=0 // pred_check_branch
    %3 = sbr.rel (0) target = $region5
  $region4: #{tile.33} parent=0 // pred_region
    _
  $region5: #{tile.33} parent=0 // pred_fallthru
    _
  %v4 = vld [vmem:[%s0] ss:$0 sm:$0xff]
  %5 = vst [vmem:[%s1] sm:$0xff] %v4
  %s6 = scalar_lea.vmem %s1, 8
  %7 = vst [vmem:[%s6] sm:$0xff] %v4

// kernel: mul.29
$region0: #{mul.29}
  %s0 = inlined_call_operand.vmem [shape: f32[9,8], index: 0, kind: input, shape index: {}]
  %s1 = inlined_call_operand.vmem [shape: f32[72], index: 1, kind: output, shape index: {}]
  $region1: #{mul.29} parent=0
    #allocation0 [shape = 'u8[4096]{0}', space=vmem, size = 0x1000, scoped, tag = 'scoped mem for output reshape']
    %v2 = vld [vmem:[%s0] sm:$0x1]
    %vm3 = vcmask 64512
    %4 = vst.msk [vmem:[#allocation0] sm:$0x1] %vm3, %v2
    %s5 = scalar_lea.vmem %s0, 8
    %v6 = vld [vmem:[%s5] sm:$0x1]
    %7 = vrot.lane.b32.xlu0 %v6, 64
    %v8 = vpop.permute.xlu0 %7
    %vm9 = vcmask 589312
    %10 = vst.msk [vmem:[#allocation0] sm:$0x1] %vm9, %v8
    %s11 = scalar_lea.vmem %s0, 7
    %v12 = vld [vmem:[%s11] sm:$0x1]
    %13 = vrot.lane.b32.xlu0 %v12, 56
    %v14 = vpop.permute.xlu0 %13
    %vm15 = vcmask 523712
    %16 = vst.msk [vmem:[#allocation0] sm:$0x1] %vm15, %v14
    %s17 = scalar_lea.vmem %s0, 6
    %v18 = vld [vmem:[%s17] sm:$0x1]
    %19 = vrot.lane.b32.xlu0 %v18, 48
    %v20 = vpop.permute.xlu0 %19
    %vm21 = vcmask 458112
    %22 = vst.msk [vmem:[#allocation0] sm:$0x1] %vm21, %v20
    %s23 = scalar_lea.vmem %s0, 5
    %v24 = vld [vmem:[%s23] sm:$0x1]
    %25 = vrot.lane.b32.xlu0 %v24, 40
    %v26 = vpop.permute.xlu0 %25
    %vm27 = vcmask 392512
    %28 = vst.msk [vmem:[#allocation0] sm:$0x1] %vm27, %v26
    %s29 = scalar_lea.vmem %s0, 4
    %v30 = vld [vmem:[%s29] sm:$0x1]
    %31 = vrot.lane.b32.xlu0 %v30, 32
    %v32 = vpop.permute.xlu0 %31
    %vm33 = vcmask 326912
    %34 = vst.msk [vmem:[#allocation0] sm:$0x1] %vm33, %v32
    %s35 = scalar_lea.vmem %s0, 3
    %v36 = vld [vmem:[%s35] sm:$0x1]
    %37 = vrot.lane.b32.xlu0 %v36, 24
    %v38 = vpop.permute.xlu0 %37
    %vm39 = vcmask 261312
    %40 = vst.msk [vmem:[#allocation0] sm:$0x1] %vm39, %v38
    %s41 = scalar_lea.vmem %s0, 2
    %v42 = vld [vmem:[%s41] sm:$0x1]
    %43 = vrot.lane.b32.xlu0 %v42, 16
    %v44 = vpop.permute.xlu0 %43
    %vm45 = vcmask 195712
    %46 = vst.msk [vmem:[#allocation0] sm:$0x1] %vm45, %v44
    %s47 = scalar_lea.vmem %s0, 1
    %v48 = vld [vmem:[%s47] sm:$0x1]
    %49 = vrot.lane.b32.xlu0 %v48, 8
    %v50 = vpop.permute.xlu0 %49
    %vm51 = vcmask 130112
    %52 = vst.msk [vmem:[#allocation0] sm:$0x1] %vm51, %v50
    %s54 = sshll.u32 1, 1
    %s55 = ssub.s32 %s54, 1
    %v57 = vld [vmem:[#allocation0] sm:%s55]
    %s58 = sshll.u32 1, 1
    %s59 = ssub.s32 %s58, 1
    %60 = vst [vmem:[%s1] sm:%s59] %v57

// kernel: tile.43
$region0: #{tile.43}
  #allocation0 [shape = 's32[1]{0}', space=sflag, size = 0x4, scoped, tag = 'scoped memory for tile.43']
  %s0 = inlined_call_operand.vmem [shape: f32[16], index: 0, kind: input, shape index: {}]
  %s1 = inlined_call_operand.vmem [shape: f32[9,16], index: 1, kind: output, shape index: {}]
  // Predicated region
  $region2: #{tile.43} parent=0 // pred_check
    _
  $region3: #{tile.43} parent=0 // pred_check_branch
    %3 = sbr.rel (0) target = $region5
  $region4: #{tile.43} parent=0 // pred_region
    _
  $region5: #{tile.43} parent=0 // pred_fallthru
    _
  %v4 = vld [vmem:[%s0] ss:$0 sm:$0xff]
  %5 = vst [vmem:[%s1] sm:$0xff] %v4
  %s6 = scalar_lea.vmem %s1, 8
  %7 = vst [vmem:[%s6] sm:$0xff] %v4

// kernel: mul.36
$region0: #{mul.36}
  %s0 = inlined_call_operand.vmem [shape: f32[9,16], index: 0, kind: input, shape index: {}]
  %s1 = inlined_call_operand.vmem [shape: f32[144], index: 1, kind: output, shape index: {}]
  $region1: #{mul.36} parent=0
    #allocation0 [shape = 'u8[4096]{0}', space=vmem, size = 0x1000, scoped, tag = 'scoped mem for output reshape']
    %s2 = smov 3
    %v3 = vld [vmem:[%s0] ss:$8 sm:%s2]
    %vm4 = vcmask 130048
    %5 = vst.msk [vmem:[#allocation0] sm:$0x3] %vm4, %v3
    %s6 = scalar_lea.vmem %s0, 7
    %v7 = vld [vmem:[%s6] sm:$0x1]
    %8 = vrot.lane.b32.xlu0 %v7, 112
    %v9 = vpop.permute.xlu0 %8
    %vm10 = vcmask 1048448
    %11 = vst.msk [vmem:[#allocation0] sm:$0x1] %vm10, %v9
    %s12 = scalar_lea.vmem %s0, 6
    %v13 = vld [vmem:[%s12] sm:$0x1]
    %14 = vrot.lane.b32.xlu0 %v13, 96
    %v15 = vpop.permute.xlu0 %14
    %vm16 = vcmask 917248
    %17 = vst.msk [vmem:[#allocation0] sm:$0x1] %vm16, %v15
    %s18 = scalar_lea.vmem %s0, 5
    %v19 = vld [vmem:[%s18] sm:$0x1]
    %20 = vrot.lane.b32.xlu0 %v19, 80
    %v21 = vpop.permute.xlu0 %20
    %vm22 = vcmask 786048
    %23 = vst.msk [vmem:[#allocation0] sm:$0x1] %vm22, %v21
    %s24 = scalar_lea.vmem %s0, 4
    %v25 = vld [vmem:[%s24] sm:$0x1]
    %26 = vrot.lane.b32.xlu0 %v25, 64
    %v27 = vpop.permute.xlu0 %26
    %vm28 = vcmask 654848
    %29 = vst.msk [vmem:[#allocation0] sm:$0x1] %vm28, %v27
    %s30 = scalar_lea.vmem %s0, 3
    %v31 = vld [vmem:[%s30] sm:$0x1]
    %32 = vrot.lane.b32.xlu0 %v31, 48
    %v33 = vpop.permute.xlu0 %32
    %vm34 = vcmask 523648
    %35 = vst.msk [vmem:[#allocation0] sm:$0x1] %vm34, %v33
    %s36 = scalar_lea.vmem %s0, 2
    %v37 = vld [vmem:[%s36] sm:$0x1]
    %38 = vrot.lane.b32.xlu0 %v37, 32
    %v39 = vpop.permute.xlu0 %38
    %vm40 = vcmask 392448
    %41 = vst.msk [vmem:[#allocation0] sm:$0x1] %vm40, %v39
    %s42 = scalar_lea.vmem %s0, 1
    %v43 = vld [vmem:[%s42] sm:$0x1]
    %44 = vrot.lane.b32.xlu0 %v43, 16
    %v45 = vpop.permute.xlu0 %44
    %vm46 = vcmask 261248
    %47 = vst.msk [vmem:[#allocation0] sm:$0x1] %vm46, %v45
    %s49 = sshll.u32 1, 2
    %s50 = ssub.s32 %s49, 1
    %v52 = vld [vmem:[#allocation0] sm:%s50]
    %s53 = sshll.u32 1, 2
    %s54 = ssub.s32 %s53, 1
    %55 = vst [vmem:[%s1] sm:%s54] %v52

// kernel: cough_classifier_forward.6
$region0: #{cough_classifier_forward.6}
  #allocation0 [shape = 'u32[]', space=smem, size = 0x4, offset = 0x4, fixed_abs, tag = 'smem constant byte address 0x4 - core index']
  #allocation1 [shape = 'u32[144,128]{1,0:T(1,128)}', space=vmem, size = 0x12000, scoped, tag = 'internal scratch']
  %s0 = inlined_call_operand.vmem [shape: bf16[32,72], index: 0, kind: input, shape index: {}]
  %s1 = inlined_call_operand.vmem [shape: bf16[72,128], index: 1, kind: input, shape index: {}]
  %s2 = inlined_call_operand.vmem [shape: f32[1,128], index: 2, kind: input, shape index: {}]
  %s3 = inlined_call_operand.vmem [shape: bf16[32,128], index: 3, kind: output, shape index: {0}]
  %s4 = inlined_call_operand.vmem [shape: f32[8,128], index: 4, kind: output, shape index: {1}]
  %5 = xla_tuple %s3, %s4
  %s6 = sld [smem:[#allocation0]]
  $region30: #{cough_classifier_forward.6} parent=0
    _
  %s8 = ssub.s32 1, %s6
  %s9 = scalar_select 0, %s8, %s6
  // Predicated region
  $region2: #{cough_classifier_forward.6} parent=0 // pred_check
    _
  $region3: #{cough_classifier_forward.6} parent=0 // pred_check_branch
    %11 = sbr.rel (0) target = $region5
  $region4: #{cough_classifier_forward.6} parent=0 // pred_region
    _
  $region5: #{cough_classifier_forward.6} parent=0 // pred_fallthru
    _
  // Predicated region
  $region6: #{cough_classifier_forward.6} parent=0 // pred_check
    _
  $region7: #{cough_classifier_forward.6} parent=0 // pred_check_branch
    %13 = sbr.rel (0) target = $region9
  $region8: #{cough_classifier_forward.6} parent=0 // pred_region
    _
  $region9: #{cough_classifier_forward.6} parent=0 // pred_fallthru
    _
  // Predicated region
  $region10: #{cough_classifier_forward.6} parent=0 // pred_check
    _
  $region11: #{cough_classifier_forward.6} parent=0 // pred_check_branch
    %15 = sbr.rel (0) target = $region13
  $region12: #{cough_classifier_forward.6} parent=0 // pred_region
    _
  $region13: #{cough_classifier_forward.6} parent=0 // pred_fallthru
    _
  %v17 = vld [vmem:[%s0] sm:$0xf]
  %v18 = vld [vmem:[%s0 + $0x4] sm:$0xf]
  %v19 = vld [vmem:[%s0 + $0x8] sm:$0xf]
  %v20 = vld [vmem:[%s0 + $0xc] sm:$0xf]
  %v21 = vld [vmem:[%s1] sm:$0xf]
  %v22 = vld [vmem:[%s1 + $0x4] sm:$0xf]
  %v23 = vld [vmem:[%s1 + $0x8] sm:$0xf]
  %v24 = vld [vmem:[%s1 + $0xc] sm:$0xf]
  %v25 = vld [vmem:[%s1 + $0x10] sm:$0xf]
  %v26 = vld [vmem:[%s1 + $0x14] sm:$0xf]
  %v27 = vld [vmem:[%s1 + $0x18] sm:$0xf]
  %v28 = vld [vmem:[%s1 + $0x1c] sm:$0xf]
  %v29 = vld [vmem:[%s1 + $0x20] sm:$0xf]
  %v30 = vld [vmem:[%s2] sm:$0x1]
  %v32 = vlaneseq
  %v33 = vshrl.u32 %v32, 7
  %v34 = vsub.s32 0, %v33
  %v35 = vrot.slane %v30, %v34
  %v41 = vunpack.c.l.b16 %v17
  %v42 = vunpack.c.l.b16 %v18
  %v43 = vunpack.c.l.b16 %v19
  %v44 = vunpack.c.l.b16 %v20
  %v45 = vpack.c.b16 %v42, %v41
  %v46 = vpack.c.b16 %v44, %v43
  %v56 = vunpack.c.l.b16 %v21
  %v57 = vunpack.c.l.b16 %v22
  %v58 = vunpack.c.l.b16 %v23
  %v59 = vunpack.c.l.b16 %v24
  %v60 = vunpack.c.l.b16 %v25
  %v61 = vunpack.c.l.b16 %v26
  %v62 = vunpack.c.l.b16 %v27
  %v63 = vunpack.c.l.b16 %v28
  %v64 = vunpack.c.l.b16 %v29
  %v65 = vpack.c.b16 %v57, %v56
  %v66 = vpack.c.b16 %v59, %v58
  %v67 = vpack.c.b16 %v61, %v60
  %v68 = vpack.c.b16 %v63, %v62
  %v69 = vpack.c.b16 %v64, %v64
  %vm74 = vcmask 588800
  %v76 = vsel %vm74, %v45, 0
  %v79 = vsel %vm74, %v46, 0
  %vm81 = vcmask 1043456
  %v83 = vsel %vm81, %v69, 0
  %85 = vmatprep.subr.bf16.mxu0 0
  %86 = vmatpush1.bf16.msra.mxu0 0
  %87 = vmatprep.subr.bf16.mxu0 0
  %88 = vmatpush1.bf16.msra.mxu0 0
  %89 = vmatprep.subr.bf16.mxu0 0
  %90 = vmatpush1.bf16.msra.mxu0 0
  %91 = vmatprep.subr.bf16.mxu0 0
  %92 = vmatpush1.bf16.msra.mxu0 %v83
  %93 = vmatprep.subr.bf16.mxu0 0
  %94 = vmatpush1.bf16.msra.mxu0 %v68
  %95 = vmatprep.subr.bf16.mxu0 0
  %96 = vmatpush1.bf16.msra.mxu0 %v67
  %97 = vmatprep.subr.bf16.mxu0 0
  %98 = vmatpush1.bf16.msra.mxu0 %v66
  %99 = vmatprep.subr.bf16.mxu0 0
  %100 = vmatpush1.bf16.msra.mxu0 %v65
  %101 = vmatprep.subr.bf16.mxu0 0
  %102 = vmatpush2.bf16.msra.mxu0 0
  %103 = vmatprep.subr.bf16.mxu0 0
  %104 = vmatpush2.bf16.msra.mxu0 0
  %105 = vmatprep.subr.bf16.mxu0 0
  %106 = vmatpush2.bf16.msra.mxu0 0
  %107 = vmatprep.subr.bf16.mxu0 0
  %108 = vmatpush2.bf16.msra.mxu0 0
  %109 = vmatprep.subr.bf16.mxu0 0
  %110 = vmatpush2.bf16.msra.mxu0 0
  %111 = vmatprep.subr.bf16.mxu0 0
  %112 = vmatpush2.bf16.msra.mxu0 0
  %113 = vmatprep.subr.bf16.mxu0 0
  %114 = vmatpush2.bf16.msra.mxu0 0
  %115 = vmatprep.subr.bf16.mxu0 0
  %116 = vmatpush2.bf16.msra.mxu0 0
  %117 = vmatprep.mubr.bf16.mxu0 0
  %118 = vmatmul.mubr.bf16.gmra.mxu0 %v76
  %v119 = vpop.f32.mrf.mxu0
  %v120 = vadd.f32 %v35, %v119
  %v121 = vpop.f32.mrf.mxu0
  %v122 = vpop.f32.mrf.mxu0
  %v123 = vadd.f32 %v35, %v122
  %v124 = vpop.f32.mrf.mxu0
  %125 = vmatprep.mubr.bf16.mxu0 0
  %126 = vmatmul.mubr.bf16.gmra.mxu0 %v79
  %v127 = vpop.f32.mrf.mxu0
  %v128 = vadd.f32 %v35, %v127
  %v129 = vpop.f32.mrf.mxu0
  %v130 = vpop.f32.mrf.mxu0
  %v131 = vadd.f32 %v35, %v130
  %v132 = vpop.f32.mrf.mxu0
  %133 = vdwg.mxu0
  %v134 = vmax.f32 %v120, 0.0
  %v135 = vmax.f32 %v123, 0.0
  %v136 = vmax.f32 %v128, 0.0
  %v137 = vmax.f32 %v131, 0.0
  %v138 = vadd.f32 %v134, %v135
  %v139 = vadd.f32 %v138, %v136
  %v140 = vadd.f32 %v139, %v137
  %v141 = vrot.slane %v140, 4
  %v142 = vadd.f32 %v140, %v141
  %v143 = vrot.slane %v142, 2
  %v144 = vadd.f32 %v142, %v143
  %v145 = vrot.slane %v144, 1
  %v146 = vadd.f32 %v144, %v145
  %v147 = vmul.f32 %v134, %v134
  %v148 = vmul.f32 %v135, %v135
  %v149 = vmul.f32 %v136, %v136
  %v150 = vmul.f32 %v137, %v137
  %v151 = vadd.f32 %v147, %v148
  %v152 = vadd.f32 %v151, %v149
  %v153 = vadd.f32 %v152, %v150
  %v154 = vrot.slane %v153, 4
  %v155 = vadd.f32 %v153, %v154
  %v156 = vrot.slane %v155, 2
  %v157 = vadd.f32 %v155, %v156
  %v158 = vrot.slane %v157, 1
  %v159 = vadd.f32 %v157, %v158
  %v160 = vlaneseq
  %v161 = vshrl.u32 %v160, 7
  %vm162 = vcmp.eq.s32.totalorder %v161, 0
  %vm163 = vcmp.eq.s32.totalorder %v161, 1
  %v164 = vsel %vm163, %v159, 0.0
  %v165 = vsel %vm162, %v146, %v164
  %166 = vst [vmem:[%s4] sm:$0xff] %v165
  %v167 = vpack.c.bf16 %v135, %v134
  %v168 = vpack.c.bf16 %v137, %v136
  %v171 = vunpack.c.l.b16 %v167
  %v172 = vunpack.c.h.b16 %v167
  %v173 = vunpack.c.l.b16 %v168
  %v174 = vunpack.c.h.b16 %v168
  %v175 = vpack.c.b16 %v171, %v171
  %v176 = vpack.c.b16 %v172, %v172
  %v177 = vpack.c.b16 %v173, %v173
  %v178 = vpack.c.b16 %v174, %v174
  %183 = vst [vmem:[%s3] sm:$0xf] %v175
  %184 = vst [vmem:[%s3 + $0x4] sm:$0xf] %v176
  %185 = vst [vmem:[%s3 + $0x8] sm:$0xf] %v177
  %186 = vst [vmem:[%s3 + $0xc] sm:$0xf] %v178
  // Predicated region
  $region14: #{cough_classifier_forward.6} parent=0 // pred_check
    _
  $region15: #{cough_classifier_forward.6} parent=0 // pred_check_branch
    %188 = sbr.rel (0) target = $region17
  $region16: #{cough_classifier_forward.6} parent=0 // pred_region
    _
  $region17: #{cough_classifier_forward.6} parent=0 // pred_fallthru
    _
  // Predicated region
  $region18: #{cough_classifier_forward.6} parent=0 // pred_check
    _
  $region19: #{cough_classifier_forward.6} parent=0 // pred_check_branch
    %190 = sbr.rel (0) target = $region21
  $region20: #{cough_classifier_forward.6} parent=0 // pred_region
    _
  $region21: #{cough_classifier_forward.6} parent=0 // pred_fallthru
    _
  // Predicated region
  $region22: #{cough_classifier_forward.6} parent=0 // pred_check
    _
  $region23: #{cough_classifier_forward.6} parent=0 // pred_check_branch
    %192 = sbr.rel (0) target = $region25
  $region24: #{cough_classifier_forward.6} parent=0 // pred_region
    _
  $region25: #{cough_classifier_forward.6} parent=0 // pred_fallthru
    _
  // Predicated region
  $region26: #{cough_classifier_forward.6} parent=0 // pred_check
    _
  $region27: #{cough_classifier_forward.6} parent=0 // pred_check_branch
    %194 = sbr.rel (0) target = $region29
  $region28: #{cough_classifier_forward.6} parent=0 // pred_region
    _
  $region29: #{cough_classifier_forward.6} parent=0 // pred_fallthru
    _

// kernel: tile.53
$region0: #{tile.53}
  #allocation0 [shape = 's32[1]{0}', space=sflag, size = 0x4, scoped, tag = 'scoped memory for tile.53']
  %s0 = inlined_call_operand.vmem [shape: f32[32], index: 0, kind: input, shape index: {}]
  %s1 = inlined_call_operand.vmem [shape: f32[9,32], index: 1, kind: output, shape index: {}]
  // Predicated region
  $region2: #{tile.53} parent=0 // pred_check
    _
  $region3: #{tile.53} parent=0 // pred_check_branch
    %3 = sbr.rel (0) target = $region5
  $region4: #{tile.53} parent=0 // pred_region
    _
  $region5: #{tile.53} parent=0 // pred_fallthru
    _
  %v4 = vld [vmem:[%s0] ss:$0 sm:$0xff]
  %5 = vst [vmem:[%s1] sm:$0xff] %v4
  %s6 = scalar_lea.vmem %s1, 8
  %7 = vst [vmem:[%s6] sm:$0xff] %v4

// kernel: mul.43
$region0: #{mul.43}
  %s0 = inlined_call_operand.vmem [shape: f32[9,32], index: 0, kind: input, shape index: {}]
  %s1 = inlined_call_operand.vmem [shape: f32[288], index: 1, kind: output, shape index: {}]
  $region1: #{mul.43} parent=0
    #allocation0 [shape = 'u8[4096]{0}', space=vmem, size = 0x1000, scoped, tag = 'scoped mem for output reshape']
    %v2 = vld [vmem:[%s0] ss:$4 sm:$0x7]
    %vm3 = vcmask 261120
    %4 = vst.msk [vmem:[#allocation0] sm:$0x7] %vm3, %v2
    %s5 = scalar_lea.vmem %s0, 3
    %s6 = smov 3
    %v7 = vld [vmem:[%s5] ss:$4 sm:%s6]
    %8 = vrot.lane.b32.xlu0 %v7, 96
    %v9 = vpop.permute.xlu0 %8
    %vm10 = vcmask 1048320
    %11 = vst.msk [vmem:[#allocation0] sm:$0x3] %vm10, %v9
    %s12 = scalar_lea.vmem %s0, 2
    %s13 = smov 3
    %v14 = vld [vmem:[%s12] ss:$4 sm:%s13]
    %15 = vrot.lane.b32.xlu0 %v14, 64
    %v16 = vpop.permute.xlu0 %15
    %vm17 = vcmask 785920
    %18 = vst.msk [vmem:[#allocation0] sm:$0x3] %vm17, %v16
    %s19 = scalar_lea.vmem %s0, 1
    %s20 = smov 3
    %v21 = vld [vmem:[%s19] ss:$4 sm:%s20]
    %22 = vrot.lane.b32.xlu0 %v21, 32
    %v23 = vpop.permute.xlu0 %22
    %vm24 = vcmask 523520
    %25 = vst.msk [vmem:[#allocation0] sm:$0x3] %vm24, %v23
    %s27 = sshll.u32 1, 4
    %s28 = ssub.s32 %s27, 1
    %v30 = vld [vmem:[#allocation0] sm:%s28]
    %s31 = sshll.u32 1, 4
    %s32 = ssub.s32 %s31, 1
    %33 = vst [vmem:[%s1] sm:%s32] %v30

// kernel: cough_classifier_forward.7
$region0: #{cough_classifier_forward.7}
  #allocation0 [shape = 'u32[]', space=smem, size = 0x4, offset = 0x4, fixed_abs, tag = 'smem constant byte address 0x4 - core index']
  #allocation1 [shape = 'u32[144,128]{1,0:T(1,128)}', space=vmem, size = 0x12000, scoped, tag = 'internal scratch']
  %s0 = inlined_call_operand.vmem [shape: bf16[8,144], index: 0, kind: input, shape index: {}]
  %s1 = inlined_call_operand.vmem [shape: bf16[144,128], index: 1, kind: input, shape index: {}]
  %s2 = inlined_call_operand.vmem [shape: f32[1,128], index: 2, kind: input, shape index: {}]
  %s3 = inlined_call_operand.vmem [shape: bf16[8,128], index: 3, kind: output, shape index: {0}]
  %s4 = inlined_call_operand.vmem [shape: f32[8,128], index: 4, kind: output, shape index: {1}]
  %5 = xla_tuple %s3, %s4
  %s6 = sld [smem:[#allocation0]]
  $region30: #{cough_classifier_forward.7} parent=0
    _
  %s8 = ssub.s32 1, %s6
  %s9 = scalar_select 0, %s8, %s6
  // Predicated region
  $region2: #{cough_classifier_forward.7} parent=0 // pred_check
    _
  $region3: #{cough_classifier_forward.7} parent=0 // pred_check_branch
    %11 = sbr.rel (0) target = $region5
  $region4: #{cough_classifier_forward.7} parent=0 // pred_region
    _
  $region5: #{cough_classifier_forward.7} parent=0 // pred_fallthru
    _
  // Predicated region
  $region6: #{cough_classifier_forward.7} parent=0 // pred_check
    _
  $region7: #{cough_classifier_forward.7} parent=0 // pred_check_branch
    %13 = sbr.rel (0) target = $region9
  $region8: #{cough_classifier_forward.7} parent=0 // pred_region
    _
  $region9: #{cough_classifier_forward.7} parent=0 // pred_fallthru
    _
  // Predicated region
  $region10: #{cough_classifier_forward.7} parent=0 // pred_check
    _
  $region11: #{cough_classifier_forward.7} parent=0 // pred_check_branch
    %15 = sbr.rel (0) target = $region13
  $region12: #{cough_classifier_forward.7} parent=0 // pred_region
    _
  $region13: #{cough_classifier_forward.7} parent=0 // pred_fallthru
    _
  %v17 = vld [vmem:[%s0] sm:$0xff]
  %v18 = vld [vmem:[%s1] sm:$0xf]
  %v19 = vld [vmem:[%s1 + $0x4] sm:$0xf]
  %v20 = vld [vmem:[%s1 + $0x8] sm:$0xf]
  %v21 = vld [vmem:[%s1 + $0xc] sm:$0xf]
  %v22 = vld [vmem:[%s1 + $0x10] sm:$0xf]
  %v23 = vld [vmem:[%s1 + $0x14] sm:$0xf]
  %v24 = vld [vmem:[%s1 + $0x18] sm:$0xf]
  %v25 = vld [vmem:[%s1 + $0x1c] sm:$0xf]
  %v26 = vld [vmem:[%s1 + $0x20] sm:$0xf]
  %v27 = vld [vmem:[%s1 + $0x24] sm:$0xf]
  %v28 = vld [vmem:[%s1 + $0x28] sm:$0xf]
  %v29 = vld [vmem:[%s1 + $0x2c] sm:$0xf]
  %v30 = vld [vmem:[%s1 + $0x30] sm:$0xf]
  %v31 = vld [vmem:[%s1 + $0x34] sm:$0xf]
  %v32 = vld [vmem:[%s1 + $0x38] sm:$0xf]
  %v33 = vld [vmem:[%s1 + $0x3c] sm:$0xf]
  %v34 = vld [vmem:[%s1 + $0x40] sm:$0xf]
  %v35 = vld [vmem:[%s1 + $0x44] sm:$0xf]
  %v36 = vld [vmem:[%s2] sm:$0x1]
  %v38 = vlaneseq
  %v39 = vshrl.u32 %v38, 7
  %v40 = vsub.s32 0, %v39
  %v41 = vrot.slane %v36, %v40
  %v44 = vunpack.c.l.b16 %v17
  %v45 = vunpack.c.h.b16 %v17
  %v46 = vpack.c.b16 %v44, %v44
  %v47 = vpack.c.b16 %v45, %v45
  %v67 = vunpack.c.l.b16 %v18
  %v68 = vunpack.c.l.b16 %v19
  %v69 = vunpack.c.l.b16 %v20
  %v70 = vunpack.c.l.b16 %v21
  %v71 = vunpack.c.l.b16 %v22
  %v72 = vunpack.c.l.b16 %v23
  %v73 = vunpack.c.l.b16 %v24
  %v74 = vunpack.c.l.b16 %v25
  %v75 = vunpack.c.l.b16 %v26
  %v76 = vunpack.c.l.b16 %v27
  %v77 = vunpack.c.l.b16 %v28
  %v78 = vunpack.c.l.b16 %v29
  %v79 = vunpack.c.l.b16 %v30
  %v80 = vunpack.c.l.b16 %v31
  %v81 = vunpack.c.l.b16 %v32
  %v82 = vunpack.c.l.b16 %v33
  %v83 = vunpack.c.l.b16 %v34
  %v84 = vunpack.c.l.b16 %v35
  %v85 = vpack.c.b16 %v68, %v67
  %v86 = vpack.c.b16 %v70, %v69
  %v87 = vpack.c.b16 %v72, %v71
  %v88 = vpack.c.b16 %v74, %v73
  %v89 = vpack.c.b16 %v76, %v75
  %v90 = vpack.c.b16 %v78, %v77
  %v91 = vpack.c.b16 %v80, %v79
  %v92 = vpack.c.b16 %v82, %v81
  %v93 = vpack.c.b16 %v84, %v83
  %vm103 = vcmask 130048
  %v105 = vsel %vm103, %v47, 0
  %107 = vmatprep.subr.bf16.mxu0 0
  %108 = vmatpush1.bf16.msra.mxu0 %v92
  %109 = vmatprep.subr.bf16.mxu0 0
  %110 = vmatpush1.bf16.msra.mxu0 %v91
  %111 = vmatprep.subr.bf16.mxu0 0
  %112 = vmatpush1.bf16.msra.mxu0 %v90
  %113 = vmatprep.subr.bf16.mxu0 0
  %114 = vmatpush1.bf16.msra.mxu0 %v89
  %115 = vmatprep.subr.bf16.mxu0 0
  %116 = vmatpush1.bf16.msra.mxu0 %v88
  %117 = vmatprep.subr.bf16.mxu0 0
  %118 = vmatpush1.bf16.msra.mxu0 %v87
  %119 = vmatprep.subr.bf16.mxu0 0
  %120 = vmatpush1.bf16.msra.mxu0 %v86
  %121 = vmatprep.subr.bf16.mxu0 0
  %122 = vmatpush1.bf16.msra.mxu0 %v85
  %123 = vmatprep.subr.bf16.mxu0 0
  %124 = vmatpush2.bf16.msra.mxu0 0
  %125 = vmatprep.subr.bf16.mxu0 0
  %126 = vmatpush2.bf16.msra.mxu0 0
  %127 = vmatprep.subr.bf16.mxu0 0
  %128 = vmatpush2.bf16.msra.mxu0 0
  %129 = vmatprep.subr.bf16.mxu0 0
  %130 = vmatpush2.bf16.msra.mxu0 0
  %131 = vmatprep.subr.bf16.mxu0 0
  %132 = vmatpush2.bf16.msra.mxu0 0
  %133 = vmatprep.subr.bf16.mxu0 0
  %134 = vmatpush2.bf16.msra.mxu0 0
  %135 = vmatprep.subr.bf16.mxu0 0
  %136 = vmatpush2.bf16.msra.mxu0 0
  %137 = vmatprep.subr.bf16.mxu0 0
  %138 = vmatpush2.bf16.msra.mxu0 %v93
  %139 = vmatprep.mubr.bf16.mxu0 %v105
  %140 = vmatmul.mubr.bf16.gmra.mxu0 %v46
  %v141 = vpop.f32.mrf.mxu0
  %v142 = vadd.f32 %v41, %v141
  %v143 = vpop.f32.mrf.mxu0
  %v144 = vpop.f32.mrf.mxu0
  %v145 = vpop.f32.mrf.mxu0
  %146 = vdwg.mxu0
  %v147 = vmax.f32 %v142, 0.0
  %v148 = vrot.slane %v147, 4
  %v149 = vadd.f32 %v147, %v148
  %v150 = vrot.slane %v149, 2
  %v151 = vadd.f32 %v149, %v150
  %v152 = vrot.slane %v151, 1
  %v153 = vadd.f32 %v151, %v152
  %v154 = vmul.f32 %v147, %v147
  %v155 = vrot.slane %v154, 4
  %v156 = vadd.f32 %v154, %v155
  %v157 = vrot.slane %v156, 2
  %v158 = vadd.f32 %v156, %v157
  %v159 = vrot.slane %v158, 1
  %v160 = vadd.f32 %v158, %v159
  %v161 = vlaneseq
  %v162 = vshrl.u32 %v161, 7
  %vm163 = vcmp.eq.s32.totalorder %v162, 0
  %vm164 = vcmp.eq.s32.totalorder %v162, 1
  %v165 = vsel %vm164, %v160, 0.0
  %v166 = vsel %vm163, %v153, %v165
  %167 = vst [vmem:[%s4] sm:$0xff] %v166
  %v168 = vpack.c.bf16 %v147, %v147
  %169 = vst [vmem:[%s3] sm:$0xf] %v168
  // Predicated region
  $region14: #{cough_classifier_forward.7} parent=0 // pred_check
    _
  $region15: #{cough_classifier_forward.7} parent=0 // pred_check_branch
    %171 = sbr.rel (0) target = $region17
  $region16: #{cough_classifier_forward.7} parent=0 // pred_region
    _
  $region17: #{cough_classifier_forward.7} parent=0 // pred_fallthru
    _
  // Predicated region
  $region18: #{cough_classifier_forward.7} parent=0 // pred_check
    _
  $region19: #{cough_classifier_forward.7} parent=0 // pred_check_branch
    %173 = sbr.rel (0) target = $region21
  $region20: #{cough_classifier_forward.7} parent=0 // pred_region
    _
  $region21: #{cough_classifier_forward.7} parent=0 // pred_fallthru
    _
  // Predicated region
  $region22: #{cough_classifier_forward.7} parent=0 // pred_check
    _
  $region23: #{cough_classifier_forward.7} parent=0 // pred_check_branch
    %175 = sbr.rel (0) target = $region25
  $region24: #{cough_classifier_forward.7} parent=0 // pred_region
    _
  $region25: #{cough_classifier_forward.7} parent=0 // pred_fallthru
    _
  // Predicated region
  $region26: #{cough_classifier_forward.7} parent=0 // pred_check
    _
  $region27: #{cough_classifier_forward.7} parent=0 // pred_check_branch
    %177 = sbr.rel (0) target = $region29
  $region28: #{cough_classifier_forward.7} parent=0 // pred_region
    _
  $region29: #{cough_classifier_forward.7} parent=0 // pred_fallthru
    _

// kernel: cough_classifier_forward.9
$region0: #{cough_classifier_forward.9}
  #allocation0 [shape = 'u32[]', space=smem, size = 0x4, offset = 0x4, fixed_abs, tag = 'smem constant byte address 0x4 - core index']
  #allocation1 [shape = 'u32[144,128]{1,0:T(1,128)}', space=vmem, size = 0x12000, scoped, tag = 'internal scratch']
  #allocation2 [shape = 'f32[1,1]{1,0:T(1,128)S(1)}', space=vmem, size = 0x200, scoped, tag = 'scoped memory for cough_classifier_forward.9']
  %s0 = inlined_call_operand.vmem [shape: bf16[2,1,64], index: 0, kind: input, shape index: {}]
  %s1 = inlined_call_operand.vmem [shape: f32[1,64], index: 1, kind: input, shape index: {}]
  %s2 = inlined_call_operand.<no memory space> [shape: f32[1,1], index: 2, kind: input, shape index: {}]
  %s3 = inlined_call_operand.vmem [shape: f32[2,1], index: 3, kind: output, shape index: {}]
  %s4 = sld [smem:[#allocation0]]
  $region22: #{cough_classifier_forward.9} parent=0
    _
  %s6 = ssub.s32 1, %s4
  %s7 = scalar_select 0, %s6, %s4
  %v8 = vstv %s2
  %9 = vst [vmem:[#allocation2] sm:$0x1] %v8
  // Predicated region
  $region2: #{cough_classifier_forward.9} parent=0 // pred_check
    _
  $region3: #{cough_classifier_forward.9} parent=0 // pred_check_branch
    %11 = sbr.rel (0) target = $region5
  $region4: #{cough_classifier_forward.9} parent=0 // pred_region
    _
  $region5: #{cough_classifier_forward.9} parent=0 // pred_fallthru
    _
  // Predicated region
  $region6: #{cough_classifier_forward.9} parent=0 // pred_check
    _
  $region7: #{cough_classifier_forward.9} parent=0 // pred_check_branch
    %13 = sbr.rel (0) target = $region9
  $region8: #{cough_classifier_forward.9} parent=0 // pred_region
    _
  $region9: #{cough_classifier_forward.9} parent=0 // pred_fallthru
    _
  // Predicated region
  $region10: #{cough_classifier_forward.9} parent=0 // pred_check
    _
  $region11: #{cough_classifier_forward.9} parent=0 // pred_check_branch
    %15 = sbr.rel (0) target = $region13
  $region12: #{cough_classifier_forward.9} parent=0 // pred_region
    _
  $region13: #{cough_classifier_forward.9} parent=0 // pred_fallthru
    _
  %v16 = vld [vmem:[%s0] sm:$0x1]
  %v17 = vld [vmem:[%s0 + $0x1] sm:$0x1]
  %v18 = vunpack.c.l.bf16 %v16
  %v19 = vunpack.c.l.bf16 %v17
  %v20 = vadd.f32 %v18, 0.0
  %v21 = vadd.f32 %v19, 0.0
  %v22 = vld [vmem:[%s1] sm:$0x1]
  %v24 = vlaneseq
  %v25 = vshrl.u32 %v24, 7
  %v26 = vsub.s32 0, %v25
  %v27 = vrot.slane %v22, %v26
  %v29 = vunpack.c.l.s4 1983009808
  %v30 = vunpack.c.0.s8 %v29
  %v31 = vlaneseq
  %v32 = vshrl.u32 %v31, 7
  %v33 = vsub.s32 %v30, %v32
  %v34 = vrot.slane %v27, %v33
  %v35 = vrot.slane %v34, 1
  %v38 = vmul.f32 %v20, %v34
  %v39 = vmul.f32 %v21, %v35
  %v42 = vlaneseq
  %v43 = vshrl.u32 %v42, 7
  %v44 = vsub.s32 0, %v43
  %v45 = vrot.slane %v38, %v44
  %v46 = vlaneseq
  %v47 = vshrl.u32 %v46, 7
  %v48 = vsub.s32 0, %v47
  %v49 = vrot.slane %v39, %v48
  %vm50 = vcmask 1041409
  %v51 = vsel %vm50, %v49, %v45
  %vm53 = vcmask 517120
  %v54 = vsel %vm53, %v51, 0.0
  %55 = vadd.xlane.f32.xlu0 %v54
  %v56 = vpop.xlane.xlu0 %55
  %v57 = vld [vmem:[#allocation2] sm:$0x1]
  %v59 = vlaneseq
  %v60 = vshrl.u32 %v59, 7
  %v61 = vsub.s32 0, %v60
  %v62 = vrot.slane %v57, %v61
  %v64 = vadd.f32 %v56, %v62
  %vm65 = vcmask 1024
  %66 = vst.msk [vmem:[%s3] sm:$0x3] %vm65, %v64
  // Predicated region
  $region14: #{cough_classifier_forward.9} parent=0 // pred_check
    _
  $region15: #{cough_classifier_forward.9} parent=0 // pred_check_branch
    %68 = sbr.rel (0) target = $region17
  $region16: #{cough_classifier_forward.9} parent=0 // pred_region
    _
  $region17: #{cough_classifier_forward.9} parent=0 // pred_fallthru
    _
  // Predicated region
  $region18: #{cough_classifier_forward.9} parent=0 // pred_check
    _
  $region19: #{cough_classifier_forward.9} parent=0 // pred_check_branch
    %70 = sbr.rel (0) target = $region21
  $region20: #{cough_classifier_forward.9} parent=0 // pred_region
    _
  $region21: #{cough_classifier_forward.9} parent=0 // pred_fallthru
    _

// kernel: cough_classifier_forward.8
$region0: #{cough_classifier_forward.8}
  #allocation0 [shape = 'u32[]', space=smem, size = 0x4, offset = 0x4, fixed_abs, tag = 'smem constant byte address 0x4 - core index']
  #allocation1 [shape = 'u32[144,128]{1,0:T(1,128)}', space=vmem, size = 0x12000, scoped, tag = 'internal scratch']
  %s0 = inlined_call_operand.vmem [shape: bf16[8,288], index: 0, kind: input, shape index: {}]
  %s1 = inlined_call_operand.vmem [shape: bf16[288,128], index: 1, kind: input, shape index: {}]
  %s2 = inlined_call_operand.vmem [shape: f32[1,128], index: 2, kind: input, shape index: {}]
  %s3 = inlined_call_operand.vmem [shape: bf16[8,128], index: 3, kind: output, shape index: {0}]
  %s4 = inlined_call_operand.vmem [shape: f32[8,128], index: 4, kind: output, shape index: {1}]
  %5 = xla_tuple %s3, %s4
  %s6 = sld [smem:[#allocation0]]
  $region30: #{cough_classifier_forward.8} parent=0
    _
  %s8 = ssub.s32 1, %s6
  %s9 = scalar_select 0, %s8, %s6
  // Predicated region
  $region2: #{cough_classifier_forward.8} parent=0 // pred_check
    _
  $region3: #{cough_classifier_forward.8} parent=0 // pred_check_branch
    %11 = sbr.rel (0) target = $region5
  $region4: #{cough_classifier_forward.8} parent=0 // pred_region
    _
  $region5: #{cough_classifier_forward.8} parent=0 // pred_fallthru
    _
  // Predicated region
  $region6: #{cough_classifier_forward.8} parent=0 // pred_check
    _
  $region7: #{cough_classifier_forward.8} parent=0 // pred_check_branch
    %13 = sbr.rel (0) target = $region9
  $region8: #{cough_classifier_forward.8} parent=0 // pred_region
    _
  $region9: #{cough_classifier_forward.8} parent=0 // pred_fallthru
    _
  // Predicated region
  $region10: #{cough_classifier_forward.8} parent=0 // pred_check
    _
  $region11: #{cough_classifier_forward.8} parent=0 // pred_check_branch
    %15 = sbr.rel (0) target = $region13
  $region12: #{cough_classifier_forward.8} parent=0 // pred_region
    _
  $region13: #{cough_classifier_forward.8} parent=0 // pred_fallthru
    _
  %v17 = vld [vmem:[%s0] sm:$0xff]
  %v18 = vld [vmem:[%s0 + $0x8] sm:$0xf]
  %v19 = vld [vmem:[%s1] sm:$0xf]
  %v20 = vld [vmem:[%s1 + $0x4] sm:$0xf]
  %v21 = vld [vmem:[%s1 + $0x8] sm:$0xf]
  %v22 = vld [vmem:[%s1 + $0xc] sm:$0xf]
  %v23 = vld [vmem:[%s1 + $0x10] sm:$0xf]
  %v24 = vld [vmem:[%s1 + $0x14] sm:$0xf]
  %v25 = vld [vmem:[%s1 + $0x18] sm:$0xf]
  %v26 = vld [vmem:[%s1 + $0x1c] sm:$0xf]
  %v27 = vld [vmem:[%s1 + $0x20] sm:$0xf]
  %v28 = vld [vmem:[%s1 + $0x24] sm:$0xf]
  %v29 = vld [vmem:[%s1 + $0x28] sm:$0xf]
  %v30 = vld [vmem:[%s1 + $0x2c] sm:$0xf]
  %v31 = vld [vmem:[%s1 + $0x30] sm:$0xf]
  %v32 = vld [vmem:[%s1 + $0x34] sm:$0xf]
  %v33 = vld [vmem:[%s1 + $0x38] sm:$0xf]
  %v34 = vld [vmem:[%s1 + $0x3c] sm:$0xf]
  %v35 = vld [vmem:[%s1 + $0x40] sm:$0xf]
  %v36 = vld [vmem:[%s1 + $0x44] sm:$0xf]
  %v37 = vld [vmem:[%s1 + $0x48] sm:$0xf]
  %v38 = vld [vmem:[%s1 + $0x4c] sm:$0xf]
  %v39 = vld [vmem:[%s1 + $0x50] sm:$0xf]
  %v40 = vld [vmem:[%s1 + $0x54] sm:$0xf]
  %v41 = vld [vmem:[%s1 + $0x58] sm:$0xf]
  %v42 = vld [vmem:[%s1 + $0x5c] sm:$0xf]
  %v43 = vld [vmem:[%s1 + $0x60] sm:$0xf]
  %v44 = vld [vmem:[%s1 + $0x64] sm:$0xf]
  %v45 = vld [vmem:[%s1 + $0x68] sm:$0xf]
  %v46 = vld [vmem:[%s1 + $0x6c] sm:$0xf]
  %v47 = vld [vmem:[%s1 + $0x70] sm:$0xf]
  %v48 = vld [vmem:[%s1 + $0x74] sm:$0xf]
  %v49 = vld [vmem:[%s1 + $0x78] sm:$0xf]
  %v50 = vld [vmem:[%s1 + $0x7c] sm:$0xf]
  %v51 = vld [vmem:[%s1 + $0x80] sm:$0xf]
  %v52 = vld [vmem:[%s1 + $0x84] sm:$0xf]
  %v53 = vld [vmem:[%s1 + $0x88] sm:$0xf]
  %v54 = vld [vmem:[%s1 + $0x8c] sm:$0xf]
  %v55 = vld [vmem:[%s2] sm:$0x1]
  %v57 = vlaneseq
  %v58 = vshrl.u32 %v57, 7
  %v59 = vsub.s32 0, %v58
  %v60 = vrot.slane %v55, %v59
  %v64 = vunpack.c.l.b16 %v17
  %v65 = vunpack.c.h.b16 %v17
  %v66 = vunpack.c.l.b16 %v18
  %v67 = vpack.c.b16 %v64, %v64
  %v68 = vpack.c.b16 %v65, %v65
  %v69 = vpack.c.b16 %v66, %v66
  %v108 = vunpack.c.l.b16 %v19
  %v109 = vunpack.c.l.b16 %v20
  %v110 = vunpack.c.l.b16 %v21
  %v111 = vunpack.c.l.b16 %v22
  %v112 = vunpack.c.l.b16 %v23
  %v113 = vunpack.c.l.b16 %v24
  %v114 = vunpack.c.l.b16 %v25
  %v115 = vunpack.c.l.b16 %v26
  %v116 = vunpack.c.l.b16 %v27
  %v117 = vunpack.c.l.b16 %v28
  %v118 = vunpack.c.l.b16 %v29
  %v119 = vunpack.c.l.b16 %v30
  %v120 = vunpack.c.l.b16 %v31
  %v121 = vunpack.c.l.b16 %v32
  %v122 = vunpack.c.l.b16 %v33
  %v123 = vunpack.c.l.b16 %v34
  %v124 = vunpack.c.l.b16 %v35
  %v125 = vunpack.c.l.b16 %v36
  %v126 = vunpack.c.l.b16 %v37
  %v127 = vunpack.c.l.b16 %v38
  %v128 = vunpack.c.l.b16 %v39
  %v129 = vunpack.c.l.b16 %v40
  %v130 = vunpack.c.l.b16 %v41
  %v131 = vunpack.c.l.b16 %v42
  %v132 = vunpack.c.l.b16 %v43
  %v133 = vunpack.c.l.b16 %v44
  %v134 = vunpack.c.l.b16 %v45
  %v135 = vunpack.c.l.b16 %v46
  %v136 = vunpack.c.l.b16 %v47
  %v137 = vunpack.c.l.b16 %v48
  %v138 = vunpack.c.l.b16 %v49
  %v139 = vunpack.c.l.b16 %v50
  %v140 = vunpack.c.l.b16 %v51
  %v141 = vunpack.c.l.b16 %v52
  %v142 = vunpack.c.l.b16 %v53
  %v143 = vunpack.c.l.b16 %v54
  %v144 = vpack.c.b16 %v109, %v108
  %v145 = vpack.c.b16 %v111, %v110
  %v146 = vpack.c.b16 %v113, %v112
  %v147 = vpack.c.b16 %v115, %v114
  %v148 = vpack.c.b16 %v117, %v116
  %v149 = vpack.c.b16 %v119, %v118
  %v150 = vpack.c.b16 %v121, %v120
  %v151 = vpack.c.b16 %v123, %v122
  %v152 = vpack.c.b16 %v125, %v124
  %v153 = vpack.c.b16 %v127, %v126
  %v154 = vpack.c.b16 %v129, %v128
  %v155 = vpack.c.b16 %v131, %v130
  %v156 = vpack.c.b16 %v133, %v132
  %v157 = vpack.c.b16 %v135, %v134
  %v158 = vpack.c.b16 %v137, %v136
  %v159 = vpack.c.b16 %v139, %v138
  %v160 = vpack.c.b16 %v141, %v140
  %v161 = vpack.c.b16 %v143, %v142
  %vm180 = vcmask 261120
  %v182 = vsel %vm180, %v69, 0
  %184 = vmatprep.subr.bf16.mxu0 0
  %185 = vmatpush1.bf16.msra.mxu0 %v151
  %186 = vmatprep.subr.bf16.mxu0 0
  %187 = vmatpush1.bf16.msra.mxu0 %v150
  %188 = vmatprep.subr.bf16.mxu0 0
  %189 = vmatpush1.bf16.msra.mxu0 %v149
  %190 = vmatprep.subr.bf16.mxu0 0
  %191 = vmatpush1.bf16.msra.mxu0 %v148
  %192 = vmatprep.subr.bf16.mxu0 0
  %193 = vmatpush1.bf16.msra.mxu0 %v147
  %194 = vmatprep.subr.bf16.mxu0 0
  %195 = vmatpush1.bf16.msra.mxu0 %v146
  %196 = vmatprep.subr.bf16.mxu0 0
  %197 = vmatpush1.bf16.msra.mxu0 %v145
  %198 = vmatprep.subr.bf16.mxu0 0
  %199 = vmatpush1.bf16.msra.mxu0 %v144
  %200 = vmatprep.subr.bf16.mxu0 0
  %201 = vmatpush2.bf16.msra.mxu0 %v159
  %202 = vmatprep.subr.bf16.mxu0 0
  %203 = vmatpush2.bf16.msra.mxu0 %v158
  %204 = vmatprep.subr.bf16.mxu0 0
  %205 = vmatpush2.bf16.msra.mxu0 %v157
  %206 = vmatprep.subr.bf16.mxu0 0
  %207 = vmatpush2.bf16.msra.mxu0 %v156
  %208 = vmatprep.subr.bf16.mxu0 0
  %209 = vmatpush2.bf16.msra.mxu0 %v155
  %210 = vmatprep.subr.bf16.mxu0 0
  %211 = vmatpush2.bf16.msra.mxu0 %v154
  %212 = vmatprep.subr.bf16.mxu0 0
  %213 = vmatpush2.bf16.msra.mxu0 %v153
  %214 = vmatprep.subr.bf16.mxu0 0
  %215 = vmatpush2.bf16.msra.mxu0 %v152
  %216 = vmatprep.mubr.bf16.mxu0 %v68
  %217 = vmatmul.mubr.bf16.gmra.mxu0 %v67
  %v218 = vpop.f32.mrf.mxu0
  %v219 = vadd.f32 %v60, %v218
  %v220 = vpop.f32.mrf.mxu0
  %v221 = vpop.f32.mrf.mxu0
  %v222 = vpop.f32.mrf.mxu0
  %223 = vdwg.mxu0
  %224 = vmatprep.subr.bf16.mxu0 0
  %225 = vmatpush1.bf16.msra.mxu0 0
  %226 = vmatprep.subr.bf16.mxu0 0
  %227 = vmatpush1.bf16.msra.mxu0 0
  %228 = vmatprep.subr.bf16.mxu0 0
  %229 = vmatpush1.bf16.msra.mxu0 0
  %230 = vmatprep.subr.bf16.mxu0 0
  %231 = vmatpush1.bf16.msra.mxu0 0
  %232 = vmatprep.subr.bf16.mxu0 0
  %233 = vmatpush1.bf16.msra.mxu0 0
  %234 = vmatprep.subr.bf16.mxu0 0
  %235 = vmatpush1.bf16.msra.mxu0 0
  %236 = vmatprep.subr.bf16.mxu0 0
  %237 = vmatpush1.bf16.msra.mxu0 %v161
  %238 = vmatprep.subr.bf16.mxu0 0
  %239 = vmatpush1.bf16.msra.mxu0 %v160
  %240 = vmatprep.subr.bf16.mxu0 0
  %241 = vmatpush2.bf16.msra.mxu0 0
  %242 = vmatprep.subr.bf16.mxu0 0
  %243 = vmatpush2.bf16.msra.mxu0 0
  %244 = vmatprep.subr.bf16.mxu0 0
  %245 = vmatpush2.bf16.msra.mxu0 0
  %246 = vmatprep.subr.bf16.mxu0 0
  %247 = vmatpush2.bf16.msra.mxu0 0
  %248 = vmatprep.subr.bf16.mxu0 0
  %249 = vmatpush2.bf16.msra.mxu0 0
  %250 = vmatprep.subr.bf16.mxu0 0
  %251 = vmatpush2.bf16.msra.mxu0 0
  %252 = vmatprep.subr.bf16.mxu0 0
  %253 = vmatpush2.bf16.msra.mxu0 0
  %254 = vmatprep.subr.bf16.mxu0 0
  %255 = vmatpush2.bf16.msra.mxu0 0
  %256 = vmatprep.mubr.bf16.mxu0 0
  %257 = vmatmul.mubr.bf16.gmra.mxu0 %v182
  %v258 = vpop.f32.mrf.mxu0
  %v259 = vadd.f32 %v219, %v258
  %v260 = vpop.f32.mrf.mxu0
  %v261 = vpop.f32.mrf.mxu0
  %v262 = vpop.f32.mrf.mxu0
  %263 = vdwg.mxu0
  %v264 = vmax.f32 %v259, 0.0
  %s265 = smul.u32 0, 8
  %v266 = vlaneseq
  %v267 = vshrl.u32 %v266, 7
  %v268 = vstv %s265
  %v269 = vadd.s32 %v268, %v267
  %vm270 = vcmp.lt.s32.totalorder %v269, 2
  %v271 = vsel %vm270, 1, 0
  %vm272 = vcmp.eq.s32.totalorder %v271, 1
  %v273 = vsel %vm272, %v264, 0.0
  %v274 = vrot.slane %v273, 4
  %v275 = vadd.f32 %v273, %v274
  %v276 = vrot.slane %v275, 2
  %v277 = vadd.f32 %v275, %v276
  %v278 = vrot.slane %v277, 1
  %v279 = vadd.f32 %v277, %v278
  %v280 = vmul.f32 %v273, %v264
  %v281 = vrot.slane %v280, 4
  %v282 = vadd.f32 %v280, %v281
  %v283 = vrot.slane %v282, 2
  %v284 = vadd.f32 %v282, %v283
  %v285 = vrot.slane %v284, 1
  %v286 = vadd.f32 %v284, %v285
  %vm287 = vcmp.eq.s32.totalorder %v267, 0
  %vm288 = vcmp.eq.s32.totalorder %v267, 1
  %v289 = vsel %vm288, %v286, 0.0
  %v290 = vsel %vm287, %v279, %v289
  %291 = vst [vmem:[%s4] sm:$0xff] %v290
  %v292 = vpack.c.bf16 %v264, %v264
  %293 = vst [vmem:[%s3] sm:$0xf] %v292
  // Predicated region
  $region14: #{cough_classifier_forward.8} parent=0 // pred_check
    _
  $region15: #{cough_classifier_forward.8} parent=0 // pred_check_branch
    %295 = sbr.rel (0) target = $region17
  $region16: #{cough_classifier_forward.8} parent=0 // pred_region
    _
  $region17: #{cough_classifier_forward.8} parent=0 // pred_fallthru
    _
  // Predicated region
  $region18: #{cough_classifier_forward.8} parent=0 // pred_check
    _
  $region19: #{cough_classifier_forward.8} parent=0 // pred_check_branch
    %297 = sbr.rel (0) target = $region21
  $region20: #{cough_classifier_forward.8} parent=0 // pred_region
    _
  $region21: #{cough_classifier_forward.8} parent=0 // pred_fallthru
    _
  // Predicated region
  $region22: #{cough_classifier_forward.8} parent=0 // pred_check
    _
  $region23: #{cough_classifier_forward.8} parent=0 // pred_check_branch
    %299 = sbr.rel (0) target = $region25
  $region24: #{cough_classifier_forward.8} parent=0 // pred_region
    _
  $region25: #{cough_classifier_forward.8} parent=0 // pred_fallthru
    _
  // Predicated region
  $region26: #{cough_classifier_forward.8} parent=0 // pred_check
    _
  $region27: #{cough_classifier_forward.8} parent=0 // pred_check_branch
    %301 = sbr.rel (0) target = $region29
  $region28: #{cough_classifier_forward.8} parent=0 // pred_region
    _
  $region29: #{cough_classifier_forward.8} parent=0 // pred_fallthru
    _

</llo_original>
